<compile_context>
chip_gen: v5e
topology: v5e:2x2
jax: 0.10.0
libtpu: 0.0.40
codegen_flags: <defaults>
</compile_context>

<pallas_src>
import functools

import jax
import jax.numpy as jnp
from jax.experimental import pallas as pl
from jax.experimental.pallas import tpu as pltpu


def _residual_block_kernel(seed_ref, x_ref, w_ref, b_ref, gamma_ref, beta_ref,
                           o_ref, *, train, drop_rate, eps, bf16_epilogue):
    # seed_ref:  (1,)     SMEM scalar (dropout seed; unused in eval mode)
    # x_ref:     (TB, D)  input tile (also the residual), native dtype
    # w_ref:     (D, D)   linear weight [in, out], native dtype, VMEM-resident
    # b_ref:     (1, D)   linear bias
    # gamma_ref: (1, D)   LayerNorm weight
    # beta_ref:  (1, D)   LayerNorm bias
    x = x_ref[...]

    # Linear on the MXU: native-dtype operands, f32 accumulation.
    h = jnp.dot(x, w_ref[...], preferred_element_type=jnp.float32)
    h = h + b_ref[...].astype(jnp.float32)

    # LayerNorm (eps=1e-5, biased variance) -- one-pass sum / sum-of-squares.
    inv_d = jnp.float32(1.0 / h.shape[-1])
    mean = jnp.sum(h, axis=-1, keepdims=True) * inv_d
    mean_sq = jnp.sum(h * h, axis=-1, keepdims=True) * inv_d
    var = jnp.maximum(mean_sq - mean * mean, 0.0)   # clamp cancellation noise
    hn = (h - mean) * jax.lax.rsqrt(var + eps)
    hn = hn * gamma_ref[...].astype(jnp.float32) + beta_ref[...].astype(jnp.float32)

    # Epilogue dtype: bf16 when the I/O dtype is bf16 on a bf16-VPU chip
    # (v6e/v7x), f32 otherwise.  Weak-typed Python constants keep this dtype.
    ep_dtype = jnp.bfloat16 if bf16_epilogue else jnp.float32
    hn = hn.astype(ep_dtype)
    res = x.astype(ep_dtype)

    # LeakyReLU(negative_slope=0.1)
    act = jnp.where(hn >= 0, hn, 0.1 * hn)

    # Dropout: `train` is a Python-static flag (eval mode -> identity).
    if train and drop_rate > 0.0:
        pltpu.prng_seed(seed_ref[0] + pl.program_id(0))
        bits = pltpu.bitcast(pltpu.prng_random_bits(act.shape), jnp.uint32)
        threshold = jnp.uint32(min(int(drop_rate * 4294967296.0), 4294967295))
        keep = bits >= threshold
        act = jnp.where(keep, act * (1.0 / (1.0 - drop_rate)), 0.0)
    # TODO(synk): training-mode dropout matches nn.Dropout(0.3) semantics but
    # is not bit-identical to torch's RNG stream, and the mask depends on the
    # chosen batch tiling (seed folded with program_id per tile).

    # Residual add; write back in the output dtype.
    o_ref[...] = (act + res).astype(o_ref.dtype)


def _device_kind():
    try:
        return jax.devices()[0].device_kind.lower()
    except Exception:
        return ""


def _num_tensorcores():
    kind = _device_kind()
    # Megacore parts (2 TensorCores behind one device): v4 and v7x.
    return 2 if ("v4" in kind or "v7" in kind) else 1


def _bf16_vpu_ok():
    kind = _device_kind()
    return ("v6" in kind) or ("v7" in kind)


def _physical_vmem_bytes():
    try:
        return int(pltpu.get_tpu_info().vmem_capacity_bytes)
    except Exception:
        return 64 * 1024 * 1024      # conservative: v7x per-TC VMEM


def _pick_tile_b(B, D, itemsize, two_cores):
    """Largest batch tile that divides B (avoids the pad/slice round trip).

    Targets >= ~2 MiB of in+out HBM traffic per grid step so the ~0.35 us
    fixed per-step cost is amortized; splits into >= 2 steps only on megacore
    parts and only when each step still clears that target.
    Returns (tile_b, need_pad).
    """
    cap = 4096
    min_rows = max(8, (2 * 1024 * 1024) // max(1, 2 * D * itemsize))
    if two_cores and (B // 2) >= min_rows:
        cap = min(cap, max(min_rows, B // 2))
    if B <= cap:
        return B, False                       # single full-extent tile
    # Largest divisor of B <= cap that is a multiple of 8 (sublane aligned).
    start = cap - (cap % 8)
    for t in range(start, 7, -8):
        if B % t == 0:
            return t, False
    # TODO(synk): a masked last tile would avoid the padded copy for batch
    # sizes with no aligned divisor; fall back to padding for now.
    return cap, True


def _vmem_limit_bytes(tile_b, D, x_itemsize, w_itemsize, weight_bufs):
    weight = weight_bufs * D * D * w_itemsize        # resident W
    io_tiles = 2 * 2 * tile_b * D * x_itemsize       # x + out, double-buffered
    params = 2 * 3 * max(D, 128) * 4                 # bias / gamma / beta
    epilogue = 5 * tile_b * D * 4                    # f32 temporaries headroom
    need = weight + io_tiles + params + epilogue
    cap = int(0.8 * _physical_vmem_bytes())          # leave compiler headroom
    return int(min(max(int(1.5 * need), 32 * 1024 * 1024), cap))


def residual_block(x, w_t, b, gamma, beta, *, tile_b=None, drop_rate=0.3,
                   train=False, seed=0):
    """Fused ResidualBlock forward.

    x:              [B, D]  input (and residual), f32 or bf16
    w_t:            [D, D]  Linear weight pre-transposed to [in, out]
    b, gamma, beta: [D]     Linear bias / LayerNorm weight / LayerNorm bias
    """
    B, D = x.shape
    assert w_t.shape == (D, D), "residual add requires input_dim == output_dim"
    assert 0.0 <= drop_rate < 1.0, "drop_rate must be in [0, 1)"

    itemsize = jnp.dtype(x.dtype).itemsize
    w_itemsize = jnp.dtype(w_t.dtype).itemsize
    if tile_b is None:
        tile_b, need_pad = _pick_tile_b(B, D, itemsize, _num_tensorcores() >= 2)
    else:
        tile_b = max(1, min(tile_b, B))
        need_pad = (B % tile_b) != 0

    pad = (-B) % tile_b if need_pad else 0
    x_in = jnp.pad(x, ((0, pad), (0, 0))) if pad else x
    Bp = B + pad

    b2 = b.reshape(1, D)
    g2 = gamma.reshape(1, D)
    be2 = beta.reshape(1, D)
    seed_arr = jnp.asarray([seed], dtype=jnp.int32)

    out_dtype = x.dtype
    bf16_epilogue = (jnp.dtype(out_dtype) == jnp.bfloat16) and _bf16_vpu_ok()

    kernel = functools.partial(
        _residual_block_kernel, train=bool(train), drop_rate=float(drop_rate),
        eps=1e-5, bf16_epilogue=bool(bf16_epilogue))

    flops = 2 * Bp * D * D + 12 * Bp * D
    bytes_accessed = 2 * Bp * D * itemsize + D * D * w_itemsize + 3 * D * 4

    x_spec = pl.BlockSpec((tile_b, D), lambda i, *_: (i, 0))
    out_spec = pl.BlockSpec((tile_b, D), lambda i, *_: (i, 0))

    def call(single_buffer_weight):
        def const_spec(shape):
            idx = lambda i, *_: (0,) * len(shape)
            if single_buffer_weight:
                # Constant index_map -> one resident buffer is enough.
                return pl.BlockSpec(shape, idx, pipeline_mode=pl.Buffered(1))
            return pl.BlockSpec(shape, idx)

        weight_bufs = 1 if single_buffer_weight else 2
        return pl.pallas_call(
            kernel,
            out_shape=jax.ShapeDtypeStruct((Bp, D), out_dtype),
            grid_spec=pltpu.PrefetchScalarGridSpec(
                num_scalar_prefetch=1,                     # dropout seed -> SMEM
                grid=(Bp // tile_b,),
                in_specs=[
                    x_spec,                                # x tile (+ residual)
                    const_spec((D, D)),                    # weight [in, out]
                    const_spec((1, D)),                    # bias
                    const_spec((1, D)),                    # ln gamma
                    const_spec((1, D)),                    # ln beta
                ],
                out_specs=out_spec,
            ),
            compiler_params=pltpu.CompilerParams(
                dimension_semantics=("parallel",),
                vmem_limit_bytes=_vmem_limit_bytes(
                    tile_b, D, itemsize, w_itemsize, weight_bufs)),
            cost_estimate=pl.CostEstimate(
                flops=int(flops), transcendentals=int(Bp),
                bytes_accessed=int(bytes_accessed)),
        )(seed_arr, x_in, w_t, b2, g2, be2)

    # TODO(synk): for very large D (single-buffered weight > ~1/3 of VMEM,
    # i.e. D >= ~3-4K bf16 on v7x) add a K-reduction grid axis ("arbitrary")
    # with an f32 VMEM accumulator instead of keeping the DxD weight resident.
    try:
        out = call(single_buffer_weight=True)
    except Exception:
        # pipeline_mode=pl.Buffered(1) not supported on this JAX version.
        out = call(single_buffer_weight=False)

    return out[:B] if pad else out


if __name__ == "__main__":
    # Residual add requires input_dim == output_dim.  Lane-dense D (multiple
    # of 128); B small enough that one full-extent tile is optimal.
    B, D = 256, 128
    key = jax.random.PRNGKey(0)
    kx, kw, kb = jax.random.split(key, 3)

    x = jax.random.normal(kx, (B, D), dtype=jnp.float32)

    # Deterministic parameter init (PyTorch-style uniform bounds for Linear).
    bound = 1.0 / (D ** 0.5)
    w = jax.random.uniform(kw, (D, D), minval=-bound, maxval=bound,
                           dtype=jnp.float32)            # [out, in] like nn.Linear
    b = jax.random.uniform(kb, (D,), minval=-bound, maxval=bound,
                           dtype=jnp.float32)
    gamma = jnp.ones((D,), dtype=jnp.float32)             # LayerNorm weight
    beta = jnp.zeros((D,), dtype=jnp.float32)             # LayerNorm bias

    w_t = w.T  # [in, out] so the kernel computes x @ W

    # Pure-JAX reference (same math, eval-mode dropout = identity).
    h = x @ w_t + b
    mean = h.mean(-1, keepdims=True)
    var = ((h - mean) ** 2).mean(-1, keepdims=True)
    hn = (h - mean) / jnp.sqrt(var + 1e-5) * gamma + beta
    ref = jnp.where(hn >= 0, hn, 0.1 * hn) + x

    # f32 I/O path: tight check.
    out = jax.block_until_ready(residual_block(x, w_t, b, gamma, beta, train=False))
    assert jnp.allclose(out, ref, atol=1e-4, rtol=1e-4), "f32 mismatch vs reference"

    # bf16 I/O path (halves HBM traffic on this mem-bound kernel): loose check.
    out_bf16 = jax.block_until_ready(
        residual_block(x.astype(jnp.bfloat16), w_t.astype(jnp.bfloat16),
                       b, gamma, beta, train=False))
    err = jnp.max(jnp.abs(out_bf16.astype(jnp.float32) - ref))
    assert jnp.isfinite(err) and err < 0.5, "bf16 mismatch vs reference"

    print("KERNEL_OK")
</pallas_src>

<mosaic_0001>
module attributes {stable_mosaic.version = 11 : i64} {
  func.func @_residual_block_kernel(%arg0: i32, %arg1: memref<1xi32, #tpu.memory_space<smem>>, %arg2: memref<256x128xf32, #tpu.memory_space<vmem>>, %arg3: memref<128x128xf32, #tpu.memory_space<vmem>>, %arg4: memref<1x128xf32, #tpu.memory_space<vmem>>, %arg5: memref<1x128xf32, #tpu.memory_space<vmem>>, %arg6: memref<1x128xf32, #tpu.memory_space<vmem>>, %arg7: memref<256x128xf32, #tpu.memory_space<vmem>>) attributes {dimension_semantics = [#tpu.dimension_semantics<parallel>], iteration_bounds = array<i64: 1>, scalar_prefetch = 1 : i64, scratch_operands = 0 : i64, tpu.core_type = #tpu.core_type<tc>, window_params = [{transform_indices = @transform_0, window_bounds = array<i64: 256, 128>}, {pipeline_mode = #tpu.pipeline_mode<synchronous>, transform_indices = @transform_1, window_bounds = array<i64: 128, 128>}, {pipeline_mode = #tpu.pipeline_mode<synchronous>, transform_indices = @transform_2, window_bounds = array<i64: 1, 128>}, {pipeline_mode = #tpu.pipeline_mode<synchronous>, transform_indices = @transform_3, window_bounds = array<i64: 1, 128>}, {pipeline_mode = #tpu.pipeline_mode<synchronous>, transform_indices = @transform_4, window_bounds = array<i64: 1, 128>}, {transform_indices = @transform_5, window_bounds = array<i64: 256, 128>}]} {
    %c0 = arith.constant 0 : index
    %c0_0 = arith.constant 0 : index
    %0 = vector.load %arg2[%c0, %c0_0] : memref<256x128xf32, #tpu.memory_space<vmem>>, vector<256x128xf32>
    %c0_1 = arith.constant 0 : index
    %c0_2 = arith.constant 0 : index
    %1 = vector.load %arg3[%c0_1, %c0_2] : memref<128x128xf32, #tpu.memory_space<vmem>>, vector<128x128xf32>
    %cst = arith.constant dense<0.000000e+00> : vector<256x128xf32>
    %2 = tpu.matmul %0, %1, %cst {dimension_numbers = #tpu.dot_dimension_numbers<[1], [0], [0], [1], [0, 0, 1, 1], [], []>} : vector<256x128xf32>, vector<128x128xf32>, vector<256x128xf32> -> vector<256x128xf32>
    %c0_3 = arith.constant 0 : index
    %c0_4 = arith.constant 0 : index
    %3 = vector.load %arg4[%c0_3, %c0_4] : memref<1x128xf32, #tpu.memory_space<vmem>>, vector<1x128xf32>
    %4 = vector.broadcast %3 : vector<1x128xf32> to vector<256x128xf32>
    %5 = arith.addf %2, %4 : vector<256x128xf32>
    %cst_5 = arith.constant dense<0.000000e+00> : vector<256xf32>
    %6 = vector.multi_reduction <add>, %5, %cst_5 [1] : vector<256x128xf32> to vector<256xf32>
    %7 = vector.shape_cast %6 : vector<256xf32> to vector<256x1xf32>
    %cst_6 = arith.constant 7.812500e-03 : f32
    %8 = vector.broadcast %cst_6 : f32 to vector<256x1xf32>
    %9 = arith.mulf %7, %8 : vector<256x1xf32>
    %10 = arith.mulf %5, %5 : vector<256x128xf32>
    %cst_7 = arith.constant dense<0.000000e+00> : vector<256xf32>
    %11 = vector.multi_reduction <add>, %10, %cst_7 [1] : vector<256x128xf32> to vector<256xf32>
    %12 = vector.shape_cast %11 : vector<256xf32> to vector<256x1xf32>
    %cst_8 = arith.constant 7.812500e-03 : f32
    %13 = vector.broadcast %cst_8 : f32 to vector<256x1xf32>
    %14 = arith.mulf %12, %13 : vector<256x1xf32>
    %15 = arith.mulf %9, %9 : vector<256x1xf32>
    %16 = arith.subf %14, %15 : vector<256x1xf32>
    %cst_9 = arith.constant 0.000000e+00 : f32
    %17 = vector.broadcast %cst_9 : f32 to vector<256x1xf32>
    %18 = arith.maximumf %16, %17 : vector<256x1xf32>
    %19 = vector.broadcast %9 : vector<256x1xf32> to vector<256x128xf32>
    %20 = arith.subf %5, %19 : vector<256x128xf32>
    %cst_10 = arith.constant 9.99999974E-6 : f32
    %21 = vector.broadcast %cst_10 : f32 to vector<256x1xf32>
    %22 = arith.addf %18, %21 : vector<256x1xf32>
    %23 = math.rsqrt %22 : vector<256x1xf32>
    %24 = vector.broadcast %23 : vector<256x1xf32> to vector<256x128xf32>
    %25 = arith.mulf %20, %24 : vector<256x128xf32>
    %c0_11 = arith.constant 0 : index
    %c0_12 = arith.constant 0 : index
    %26 = vector.load %arg5[%c0_11, %c0_12] : memref<1x128xf32, #tpu.memory_space<vmem>>, vector<1x128xf32>
    %27 = vector.broadcast %26 : vector<1x128xf32> to vector<256x128xf32>
    %28 = arith.mulf %25, %27 : vector<256x128xf32>
    %c0_13 = arith.constant 0 : index
    %c0_14 = arith.constant 0 : index
    %29 = vector.load %arg6[%c0_13, %c0_14] : memref<1x128xf32, #tpu.memory_space<vmem>>, vector<1x128xf32>
    %30 = vector.broadcast %29 : vector<1x128xf32> to vector<256x128xf32>
    %31 = arith.addf %28, %30 : vector<256x128xf32>
    %cst_15 = arith.constant 0.000000e+00 : f32
    %32 = vector.broadcast %cst_15 : f32 to vector<256x128xf32>
    %33 = arith.cmpf oge, %31, %32 : vector<256x128xf32>
    %cst_16 = arith.constant 1.000000e-01 : f32
    %34 = vector.broadcast %cst_16 : f32 to vector<256x128xf32>
    %35 = arith.mulf %34, %31 : vector<256x128xf32>
    %36 = arith.select %33, %31, %35 : vector<256x128xi1>, vector<256x128xf32>
    %37 = arith.addf %36, %0 : vector<256x128xf32>
    %c0_17 = arith.constant 0 : index
    %c0_18 = arith.constant 0 : index
    %38 = vector.load %arg7[%c0_17, %c0_18] : memref<256x128xf32, #tpu.memory_space<vmem>>, vector<256x128xf32>
    tpu.vector_store %arg7[%c0_17, %c0_18], %37 {strides = array<i32>} : memref<256x128xf32, #tpu.memory_space<vmem>>, vector<256x128xf32>,
    return
  }
  func.func @transform_0(%arg0: i32, %arg1: memref<1xi32, #tpu.memory_space<smem>>) -> (i32, i32) {
    %c0_i32 = arith.constant 0 : i32
    %c0_i32_0 = arith.constant 0 : i32
    return %arg0, %c0_i32 : i32, i32
  }
  func.func @transform_1(%arg0: i32, %arg1: memref<1xi32, #tpu.memory_space<smem>>) -> (i32, i32) {
    %c0_i32 = arith.constant 0 : i32
    %c0_i32_0 = arith.constant 0 : i32
    %c0_i32_1 = arith.constant 0 : i32
    return %c0_i32, %c0_i32_0 : i32, i32
  }
  func.func @transform_2(%arg0: i32, %arg1: memref<1xi32, #tpu.memory_space<smem>>) -> (i32, i32) {
    %c0_i32 = arith.constant 0 : i32
    %c0_i32_0 = arith.constant 0 : i32
    %c0_i32_1 = arith.constant 0 : i32
    return %c0_i32, %c0_i32_0 : i32, i32
  }
  func.func @transform_3(%arg0: i32, %arg1: memref<1xi32, #tpu.memory_space<smem>>) -> (i32, i32) {
    %c0_i32 = arith.constant 0 : i32
    %c0_i32_0 = arith.constant 0 : i32
    %c0_i32_1 = arith.constant 0 : i32
    return %c0_i32, %c0_i32_0 : i32, i32
  }
  func.func @transform_4(%arg0: i32, %arg1: memref<1xi32, #tpu.memory_space<smem>>) -> (i32, i32) {
    %c0_i32 = arith.constant 0 : i32
    %c0_i32_0 = arith.constant 0 : i32
    %c0_i32_1 = arith.constant 0 : i32
    return %c0_i32, %c0_i32_0 : i32, i32
  }
  func.func @transform_5(%arg0: i32, %arg1: memref<1xi32, #tpu.memory_space<smem>>) -> (i32, i32) {
    %c0_i32 = arith.constant 0 : i32
    %c0_i32_0 = arith.constant 0 : i32
    return %arg0, %c0_i32 : i32, i32
  }
}

module attributes {stable_mosaic.version = 11 : i64} {
  func.func @_residual_block_kernel(%arg0: i32, %arg1: memref<1xi32, #tpu.memory_space<smem>>, %arg2: memref<256x128xf32, #tpu.memory_space<vmem>>, %arg3: memref<128x128xf32, #tpu.memory_space<vmem>>, %arg4: memref<1x128xf32, #tpu.memory_space<vmem>>, %arg5: memref<1x128xf32, #tpu.memory_space<vmem>>, %arg6: memref<1x128xf32, #tpu.memory_space<vmem>>, %arg7: memref<256x128xf32, #tpu.memory_space<vmem>>) attributes {dimension_semantics = [#tpu.dimension_semantics<parallel>], iteration_bounds = array<i64: 1>, scalar_prefetch = 1 : i64, scratch_operands = 0 : i64, tpu.core_type = #tpu.core_type<tc>, window_params = [{transform_indices = @transform_0, window_bounds = array<i64: 256, 128>}, {pipeline_mode = #tpu.pipeline_mode<synchronous>, transform_indices = @transform_1, window_bounds = array<i64: 128, 128>}, {pipeline_mode = #tpu.pipeline_mode<synchronous>, transform_indices = @transform_2, window_bounds = array<i64: 1, 128>}, {pipeline_mode = #tpu.pipeline_mode<synchronous>, transform_indices = @transform_3, window_bounds = array<i64: 1, 128>}, {pipeline_mode = #tpu.pipeline_mode<synchronous>, transform_indices = @transform_4, window_bounds = array<i64: 1, 128>}, {transform_indices = @transform_5, window_bounds = array<i64: 256, 128>}]} {
    %c0 = arith.constant 0 : index
    %c0_0 = arith.constant 0 : index
    %0 = vector.load %arg2[%c0, %c0_0] : memref<256x128xf32, #tpu.memory_space<vmem>>, vector<256x128xf32>
    %c0_1 = arith.constant 0 : index
    %c0_2 = arith.constant 0 : index
    %1 = vector.load %arg3[%c0_1, %c0_2] : memref<128x128xf32, #tpu.memory_space<vmem>>, vector<128x128xf32>
    %cst = arith.constant dense<0.000000e+00> : vector<256x128xf32>
    %2 = tpu.matmul %0, %1, %cst {dimension_numbers = #tpu.dot_dimension_numbers<[1], [0], [0], [1], [0, 0, 1, 1], [], []>} : vector<256x128xf32>, vector<128x128xf32>, vector<256x128xf32> -> vector<256x128xf32>
    %c0_3 = arith.constant 0 : index
    %c0_4 = arith.constant 0 : index
    %3 = vector.load %arg4[%c0_3, %c0_4] : memref<1x128xf32, #tpu.memory_space<vmem>>, vector<1x128xf32>
    %4 = vector.broadcast %3 : vector<1x128xf32> to vector<256x128xf32>
    %5 = arith.addf %2, %4 : vector<256x128xf32>
    %cst_5 = arith.constant dense<0.000000e+00> : vector<256xf32>
    %6 = vector.multi_reduction <add>, %5, %cst_5 [1] : vector<256x128xf32> to vector<256xf32>
    %7 = vector.shape_cast %6 : vector<256xf32> to vector<256x1xf32>
    %cst_6 = arith.constant 7.812500e-03 : f32
    %8 = vector.broadcast %cst_6 : f32 to vector<256x1xf32>
    %9 = arith.mulf %7, %8 : vector<256x1xf32>
    %10 = arith.mulf %5, %5 : vector<256x128xf32>
    %cst_7 = arith.constant dense<0.000000e+00> : vector<256xf32>
    %11 = vector.multi_reduction <add>, %10, %cst_7 [1] : vector<256x128xf32> to vector<256xf32>
    %12 = vector.shape_cast %11 : vector<256xf32> to vector<256x1xf32>
    %cst_8 = arith.constant 7.812500e-03 : f32
    %13 = vector.broadcast %cst_8 : f32 to vector<256x1xf32>
    %14 = arith.mulf %12, %13 : vector<256x1xf32>
    %15 = arith.mulf %9, %9 : vector<256x1xf32>
    %16 = arith.subf %14, %15 : vector<256x1xf32>
    %cst_9 = arith.constant 0.000000e+00 : f32
    %17 = vector.broadcast %cst_9 : f32 to vector<256x1xf32>
    %18 = arith.maximumf %16, %17 : vector<256x1xf32>
    %19 = vector.broadcast %9 : vector<256x1xf32> to vector<256x128xf32>
    %20 = arith.subf %5, %19 : vector<256x128xf32>
    %cst_10 = arith.constant 9.99999974E-6 : f32
    %21 = vector.broadcast %cst_10 : f32 to vector<256x1xf32>
    %22 = arith.addf %18, %21 : vector<256x1xf32>
    %23 = math.rsqrt %22 : vector<256x1xf32>
    %24 = vector.broadcast %23 : vector<256x1xf32> to vector<256x128xf32>
    %25 = arith.mulf %20, %24 : vector<256x128xf32>
    %c0_11 = arith.constant 0 : index
    %c0_12 = arith.constant 0 : index
    %26 = vector.load %arg5[%c0_11, %c0_12] : memref<1x128xf32, #tpu.memory_space<vmem>>, vector<1x128xf32>
    %27 = vector.broadcast %26 : vector<1x128xf32> to vector<256x128xf32>
    %28 = arith.mulf %25, %27 : vector<256x128xf32>
    %c0_13 = arith.constant 0 : index
    %c0_14 = arith.constant 0 : index
    %29 = vector.load %arg6[%c0_13, %c0_14] : memref<1x128xf32, #tpu.memory_space<vmem>>, vector<1x128xf32>
    %30 = vector.broadcast %29 : vector<1x128xf32> to vector<256x128xf32>
    %31 = arith.addf %28, %30 : vector<256x128xf32>
    %cst_15 = arith.constant 0.000000e+00 : f32
    %32 = vector.broadcast %cst_15 : f32 to vector<256x128xf32>
    %33 = arith.cmpf oge, %31, %32 : vector<256x128xf32>
    %cst_16 = arith.constant 1.000000e-01 : f32
    %34 = vector.broadcast %cst_16 : f32 to vector<256x128xf32>
    %35 = arith.mulf %34, %31 : vector<256x128xf32>
    %36 = arith.select %33, %31, %35 : vector<256x128xi1>, vector<256x128xf32>
    %37 = arith.addf %36, %0 : vector<256x128xf32>
    %c0_17 = arith.constant 0 : index
    %c0_18 = arith.constant 0 : index
    %38 = vector.load %arg7[%c0_17, %c0_18] : memref<256x128xf32, #tpu.memory_space<vmem>>, vector<256x128xf32>
    tpu.vector_store %arg7[%c0_17, %c0_18], %37 {strides = array<i32>} : memref<256x128xf32, #tpu.memory_space<vmem>>, vector<256x128xf32>,
    return
  }
  func.func @transform_0(%arg0: i32, %arg1: memref<1xi32, #tpu.memory_space<smem>>) -> (i32, i32) {
    %c0_i32 = arith.constant 0 : i32
    %c0_i32_0 = arith.constant 0 : i32
    return %arg0, %c0_i32 : i32, i32
  }
  func.func @transform_1(%arg0: i32, %arg1: memref<1xi32, #tpu.memory_space<smem>>) -> (i32, i32) {
    %c0_i32 = arith.constant 0 : i32
    %c0_i32_0 = arith.constant 0 : i32
    %c0_i32_1 = arith.constant 0 : i32
    return %c0_i32, %c0_i32_0 : i32, i32
  }
  func.func @transform_2(%arg0: i32, %arg1: memref<1xi32, #tpu.memory_space<smem>>) -> (i32, i32) {
    %c0_i32 = arith.constant 0 : i32
    %c0_i32_0 = arith.constant 0 : i32
    %c0_i32_1 = arith.constant 0 : i32
    return %c0_i32, %c0_i32_0 : i32, i32
  }
  func.func @transform_3(%arg0: i32, %arg1: memref<1xi32, #tpu.memory_space<smem>>) -> (i32, i32) {
    %c0_i32 = arith.constant 0 : i32
    %c0_i32_0 = arith.constant 0 : i32
    %c0_i32_1 = arith.constant 0 : i32
    return %c0_i32, %c0_i32_0 : i32, i32
  }
  func.func @transform_4(%arg0: i32, %arg1: memref<1xi32, #tpu.memory_space<smem>>) -> (i32, i32) {
    %c0_i32 = arith.constant 0 : i32
    %c0_i32_0 = arith.constant 0 : i32
    %c0_i32_1 = arith.constant 0 : i32
    return %c0_i32, %c0_i32_0 : i32, i32
  }
  func.func @transform_5(%arg0: i32, %arg1: memref<1xi32, #tpu.memory_space<smem>>) -> (i32, i32) {
    %c0_i32 = arith.constant 0 : i32
    %c0_i32_0 = arith.constant 0 : i32
    return %arg0, %c0_i32 : i32, i32
  }
}

</mosaic_0001>

<llo_original>
// kernel: tpu_custom_call.1
$region0: #{tpu_custom_call.1}
  #allocation0 [shape = 'u32[]', space=smem, size = 0x4, offset = 0x4, fixed_abs, tag = 'smem constant byte address 0x4 - core index']
  #allocation1 [shape = 'u32[72,128]{1,0:T(1,128)}', space=vmem, size = 0x9000, scoped, tag = 'internal scratch']
  #allocation2 [shape = 's32[1]{0}', space=sflag, size = 0x4, scoped, tag = 'scoped memory for tpu_custom_call.1']
  #allocation3 [shape = 's32[1]{0:T(128)S(6)}', space=smem, size = 0x200, scoped, tag = 'prefetched SMEM operand 0']
  %s0 = inlined_call_operand.<no memory space> [shape: s32[1], index: 0, kind: input, shape index: {}]
  %s1 = inlined_call_operand.hbm [shape: f32[256,128], index: 1, kind: input, shape index: {}]
  %s2 = inlined_call_operand.hbm [shape: f32[128,128], index: 2, kind: input, shape index: {}]
  %s3 = inlined_call_operand.vmem [shape: f32[1,128], index: 3, kind: input, shape index: {}]
  %s4 = inlined_call_operand.vmem [shape: f32[1,128], index: 4, kind: input, shape index: {}]
  %s5 = inlined_call_operand.vmem [shape: f32[1,128], index: 5, kind: input, shape index: {}]
  %s6 = inlined_call_operand.hbm [shape: f32[256,128], index: 6, kind: output, shape index: {}]
  %s7 = sld [smem:[#allocation0]]
  $region38: #{tpu_custom_call.1} parent=0
    _
  %s9 = ssub.s32 1, %s7
  %s10 = scalar_select 0, %s9, %s7
  %11 = sst [smem:[#allocation3]] %s0
  $region1: #{tpu_custom_call.1} parent=0
    #allocation4 [shape = 'u8[131072]{0}', space=vmem, size = 0x20000, scoped, tag = 'input window, operand 1, single buffered']
    #allocation5 [shape = 's32[1]{0}', space=sflag, size = 0x4, scoped, tag = 'scoped memory for tpu_custom_call.1']
    #allocation6 [shape = 's32[1]{0}', space=sflag, size = 0x4, scoped, tag = 'scoped memory for tpu_custom_call.1']
    #allocation7 [shape = 'u8[65536]{0}', space=vmem, size = 0x10000, scoped, tag = 'input window, operand 2, single buffered']
    #allocation8 [shape = 's32[1]{0}', space=sflag, size = 0x4, scoped, tag = 'scoped memory for tpu_custom_call.1']
    #allocation9 [shape = 'u8[131072]{0}', space=vmem, size = 0x20000, scoped, tag = 'output window, operand 0, single buffered']
    %12 = vsyncpa [#allocation5], 0
    %13 = vsyncpa [#allocation8], 0
    %14 = vsyncpa [#allocation6], 0
    // Predicated region
    $region2: #{tpu_custom_call.1} parent=1 // pred_check
      _
    $region3: #{tpu_custom_call.1} parent=1 // pred_check_branch
      %16 = sbr.rel (0) target = $region5
    $region4: #{tpu_custom_call.1} parent=1 // pred_region
      %18 = vsyncadd [#allocation5], 0
      %s19 = sshll.u32 %s1, 4
      %s20 = int_to_ptr.hbm [resolvable:$true] %s19
      %s21 = sshll.u32 [#allocation4], 4
      %s22 = int_to_ptr.vmem [resolvable:$true] %s21
      %27 = dma.hbm_to_vmem [thread:$0]  %s20, 4096, %s22, [#allocation5], 128, 128, 8
    $region5: #{tpu_custom_call.1} parent=1 // pred_fallthru
      _
    // Predicated region
    $region6: #{tpu_custom_call.1} parent=1 // pred_check
      _
    $region7: #{tpu_custom_call.1} parent=1 // pred_check_branch
      %29 = sbr.rel (0) target = $region9
    $region8: #{tpu_custom_call.1} parent=1 // pred_region
      %31 = vsyncadd [#allocation8], 0
      %s32 = sshll.u32 %s2, 4
      %s33 = int_to_ptr.hbm [resolvable:$true] %s32
      %s34 = sshll.u32 [#allocation7], 4
      %s35 = int_to_ptr.vmem [resolvable:$true] %s34
      %40 = dma.hbm_to_vmem [thread:$0]  %s33, 2048, %s35, [#allocation8], 128, 128, 8
    $region9: #{tpu_custom_call.1} parent=1 // pred_fallthru
      _
    // Predicated region
    $region10: #{tpu_custom_call.1} parent=1 // pred_check
      _
    $region11: #{tpu_custom_call.1} parent=1 // pred_check_branch
      %42 = sbr.rel (0) target = $region13
    $region12: #{tpu_custom_call.1} parent=1 // pred_region
      _
    $region13: #{tpu_custom_call.1} parent=1 // pred_fallthru
      _
    // Predicated region
    $region14: #{tpu_custom_call.1} parent=1 // pred_check
      _
    $region15: #{tpu_custom_call.1} parent=1 // pred_check_branch
      %44 = sbr.rel (0) target = $region17
    $region16: #{tpu_custom_call.1} parent=1 // pred_region
      _
    $region17: #{tpu_custom_call.1} parent=1 // pred_fallthru
      _
    // Predicated region
    $region18: #{tpu_custom_call.1} parent=1 // pred_check
      _
    $region19: #{tpu_custom_call.1} parent=1 // pred_check_branch
      %46 = sbr.rel (0) target = $region21
    $region20: #{tpu_custom_call.1} parent=1 // pred_region
      _
    $region21: #{tpu_custom_call.1} parent=1 // pred_fallthru
      _
    // Predicated region
    $region22: #{tpu_custom_call.1} parent=1 // pred_check
      _
    $region23: #{tpu_custom_call.1} parent=1 // pred_check_branch
      %48 = sbr.rel (0) target = $region25
    $region24: #{tpu_custom_call.1} parent=1 // pred_region
      %50 = dma.done [#allocation5], 4096
    $region25: #{tpu_custom_call.1} parent=1 // pred_fallthru
      _
    // Predicated region
    $region26: #{tpu_custom_call.1} parent=1 // pred_check
      _
    $region27: #{tpu_custom_call.1} parent=1 // pred_check_branch
      %52 = sbr.rel (0) target = $region29
    $region28: #{tpu_custom_call.1} parent=1 // pred_region
      %54 = dma.done [#allocation8], 2048
    $region29: #{tpu_custom_call.1} parent=1 // pred_fallthru
      _
    %v55 = vld [vmem:[#allocation4] sm:$0xff]
    %v56 = vld [vmem:[#allocation4 + $0x8] sm:$0xff]
    %v57 = vld [vmem:[#allocation4 + $0x10] sm:$0xff]
    %v58 = vld [vmem:[#allocation4 + $0x18] sm:$0xff]
    %v59 = vld [vmem:[#allocation4 + $0x20] sm:$0xff]
    %v60 = vld [vmem:[#allocation4 + $0x28] sm:$0xff]
    %v61 = vld [vmem:[#allocation4 + $0x30] sm:$0xff]
    %v62 = vld [vmem:[#allocation4 + $0x38] sm:$0xff]
    %v63 = vld [vmem:[#allocation4 + $0x40] sm:$0xff]
    %v64 = vld [vmem:[#allocation4 + $0x48] sm:$0xff]
    %v65 = vld [vmem:[#allocation4 + $0x50] sm:$0xff]
    %v66 = vld [vmem:[#allocation4 + $0x58] sm:$0xff]
    %v67 = vld [vmem:[#allocation4 + $0x60] sm:$0xff]
    %v68 = vld [vmem:[#allocation4 + $0x68] sm:$0xff]
    %v69 = vld [vmem:[#allocation4 + $0x70] sm:$0xff]
    %v70 = vld [vmem:[#allocation4 + $0x78] sm:$0xff]
    %v71 = vld [vmem:[#allocation4 + $0x80] sm:$0xff]
    %v72 = vld [vmem:[#allocation4 + $0x88] sm:$0xff]
    %v73 = vld [vmem:[#allocation4 + $0x90] sm:$0xff]
    %v74 = vld [vmem:[#allocation4 + $0x98] sm:$0xff]
    %v75 = vld [vmem:[#allocation4 + $0xa0] sm:$0xff]
    %v76 = vld [vmem:[#allocation4 + $0xa8] sm:$0xff]
    %v77 = vld [vmem:[#allocation4 + $0xb0] sm:$0xff]
    %v78 = vld [vmem:[#allocation4 + $0xb8] sm:$0xff]
    %v79 = vld [vmem:[#allocation4 + $0xc0] sm:$0xff]
    %v80 = vld [vmem:[#allocation4 + $0xc8] sm:$0xff]
    %v81 = vld [vmem:[#allocation4 + $0xd0] sm:$0xff]
    %v82 = vld [vmem:[#allocation4 + $0xd8] sm:$0xff]
    %v83 = vld [vmem:[#allocation4 + $0xe0] sm:$0xff]
    %v84 = vld [vmem:[#allocation4 + $0xe8] sm:$0xff]
    %v85 = vld [vmem:[#allocation4 + $0xf0] sm:$0xff]
    %v86 = vld [vmem:[#allocation4 + $0xf8] sm:$0xff]
    %v87 = vld [vmem:[#allocation7] sm:$0xff]
    %v88 = vld [vmem:[#allocation7 + $0x8] sm:$0xff]
    %v89 = vld [vmem:[#allocation7 + $0x10] sm:$0xff]
    %v90 = vld [vmem:[#allocation7 + $0x18] sm:$0xff]
    %v91 = vld [vmem:[#allocation7 + $0x20] sm:$0xff]
    %v92 = vld [vmem:[#allocation7 + $0x28] sm:$0xff]
    %v93 = vld [vmem:[#allocation7 + $0x30] sm:$0xff]
    %v94 = vld [vmem:[#allocation7 + $0x38] sm:$0xff]
    %v95 = vld [vmem:[#allocation7 + $0x40] sm:$0xff]
    %v96 = vld [vmem:[#allocation7 + $0x48] sm:$0xff]
    %v97 = vld [vmem:[#allocation7 + $0x50] sm:$0xff]
    %v98 = vld [vmem:[#allocation7 + $0x58] sm:$0xff]
    %v99 = vld [vmem:[#allocation7 + $0x60] sm:$0xff]
    %v100 = vld [vmem:[#allocation7 + $0x68] sm:$0xff]
    %v101 = vld [vmem:[#allocation7 + $0x70] sm:$0xff]
    %v102 = vld [vmem:[#allocation7 + $0x78] sm:$0xff]
    %v103 = vld [vmem:[%s3] sm:$0x1]
    %v105 = vperm.slane %v103, 0
    %107 = vmatpush.msra.mxu0 %v102
    %108 = vmatpush.msra.mxu0 %v101
    %109 = vmatpush.msra.mxu0 %v100
    %110 = vmatpush.msra.mxu0 %v99
    %111 = vmatpush.msra.mxu0 %v98
    %112 = vmatpush.msra.mxu0 %v97
    %113 = vmatpush.msra.mxu0 %v96
    %114 = vmatpush.msra.mxu0 %v95
    %115 = vmatpush.msra.mxu0 %v94
    %116 = vmatpush.msra.mxu0 %v93
    %117 = vmatpush.msra.mxu0 %v92
    %118 = vmatpush.msra.mxu0 %v91
    %119 = vmatpush.msra.mxu0 %v90
    %120 = vmatpush.msra.mxu0 %v89
    %121 = vmatpush.msra.mxu0 %v88
    %122 = vmatpush.msra.mxu0 %v87
    %123 = vmatmul.f32.gmra.mxu0 %v55
    %v124 = vpop.f32.mrf.mxu0
    %v125 = vadd.f32 %v105, %v124
    %126 = vmatmul.f32.gmra.mxu0 %v56
    %v127 = vpop.f32.mrf.mxu0
    %v128 = vadd.f32 %v105, %v127
    %129 = vmatmul.f32.gmra.mxu0 %v57
    %v130 = vpop.f32.mrf.mxu0
    %v131 = vadd.f32 %v105, %v130
    %132 = vmatmul.f32.gmra.mxu0 %v58
    %v133 = vpop.f32.mrf.mxu0
    %v134 = vadd.f32 %v105, %v133
    %135 = vmatmul.f32.gmra.mxu0 %v59
    %v136 = vpop.f32.mrf.mxu0
    %v137 = vadd.f32 %v105, %v136
    %138 = vmatmul.f32.gmra.mxu0 %v60
    %v139 = vpop.f32.mrf.mxu0
    %v140 = vadd.f32 %v105, %v139
    %141 = vmatmul.f32.gmra.mxu0 %v61
    %v142 = vpop.f32.mrf.mxu0
    %v143 = vadd.f32 %v105, %v142
    %144 = vmatmul.f32.gmra.mxu0 %v62
    %v145 = vpop.f32.mrf.mxu0
    %v146 = vadd.f32 %v105, %v145
    %147 = vmatmul.f32.gmra.mxu0 %v63
    %v148 = vpop.f32.mrf.mxu0
    %v149 = vadd.f32 %v105, %v148
    %150 = vmatmul.f32.gmra.mxu0 %v64
    %v151 = vpop.f32.mrf.mxu0
    %v152 = vadd.f32 %v105, %v151
    %153 = vmatmul.f32.gmra.mxu0 %v65
    %v154 = vpop.f32.mrf.mxu0
    %v155 = vadd.f32 %v105, %v154
    %156 = vmatmul.f32.gmra.mxu0 %v66
    %v157 = vpop.f32.mrf.mxu0
    %v158 = vadd.f32 %v105, %v157
    %159 = vmatmul.f32.gmra.mxu0 %v67
    %v160 = vpop.f32.mrf.mxu0
    %v161 = vadd.f32 %v105, %v160
    %162 = vmatmul.f32.gmra.mxu0 %v68
    %v163 = vpop.f32.mrf.mxu0
    %v164 = vadd.f32 %v105, %v163
    %165 = vmatmul.f32.gmra.mxu0 %v69
    %v166 = vpop.f32.mrf.mxu0
    %v167 = vadd.f32 %v105, %v166
    %168 = vmatmul.f32.gmra.mxu0 %v70
    %v169 = vpop.f32.mrf.mxu0
    %v170 = vadd.f32 %v105, %v169
    %171 = vmatmul.f32.gmra.mxu0 %v71
    %v172 = vpop.f32.mrf.mxu0
    %v173 = vadd.f32 %v105, %v172
    %174 = vmatmul.f32.gmra.mxu0 %v72
    %v175 = vpop.f32.mrf.mxu0
    %v176 = vadd.f32 %v105, %v175
    %177 = vmatmul.f32.gmra.mxu0 %v73
    %v178 = vpop.f32.mrf.mxu0
    %v179 = vadd.f32 %v105, %v178
    %180 = vmatmul.f32.gmra.mxu0 %v74
    %v181 = vpop.f32.mrf.mxu0
    %v182 = vadd.f32 %v105, %v181
    %183 = vmatmul.f32.gmra.mxu0 %v75
    %v184 = vpop.f32.mrf.mxu0
    %v185 = vadd.f32 %v105, %v184
    %186 = vmatmul.f32.gmra.mxu0 %v76
    %v187 = vpop.f32.mrf.mxu0
    %v188 = vadd.f32 %v105, %v187
    %189 = vmatmul.f32.gmra.mxu0 %v77
    %v190 = vpop.f32.mrf.mxu0
    %v191 = vadd.f32 %v105, %v190
    %192 = vmatmul.f32.gmra.mxu0 %v78
    %v193 = vpop.f32.mrf.mxu0
    %v194 = vadd.f32 %v105, %v193
    %195 = vmatmul.f32.gmra.mxu0 %v79
    %v196 = vpop.f32.mrf.mxu0
    %v197 = vadd.f32 %v105, %v196
    %198 = vmatmul.f32.gmra.mxu0 %v80
    %v199 = vpop.f32.mrf.mxu0
    %v200 = vadd.f32 %v105, %v199
    %201 = vmatmul.f32.gmra.mxu0 %v81
    %v202 = vpop.f32.mrf.mxu0
    %v203 = vadd.f32 %v105, %v202
    %204 = vmatmul.f32.gmra.mxu0 %v82
    %v205 = vpop.f32.mrf.mxu0
    %v206 = vadd.f32 %v105, %v205
    %207 = vmatmul.f32.gmra.mxu0 %v83
    %v208 = vpop.f32.mrf.mxu0
    %v209 = vadd.f32 %v105, %v208
    %210 = vmatmul.f32.gmra.mxu0 %v84
    %v211 = vpop.f32.mrf.mxu0
    %v212 = vadd.f32 %v105, %v211
    %213 = vmatmul.f32.gmra.mxu0 %v85
    %v214 = vpop.f32.mrf.mxu0
    %v215 = vadd.f32 %v105, %v214
    %216 = vmatmul.f32.gmra.mxu0 %v86
    %v217 = vpop.f32.mrf.mxu0
    %v218 = vadd.f32 %v105, %v217
    %219 = vdwg.mxu0
    %220 = vadd.xlane.f32.xlu0 %v125
    %v221 = vpop.xlane.xlu0 %220
    %222 = vadd.xlane.f32.xlu0 %v128
    %v223 = vpop.xlane.xlu0 %222
    %224 = vadd.xlane.f32.xlu0 %v131
    %v225 = vpop.xlane.xlu0 %224
    %226 = vadd.xlane.f32.xlu0 %v134
    %v227 = vpop.xlane.xlu0 %226
    %228 = vadd.xlane.f32.xlu0 %v137
    %v229 = vpop.xlane.xlu0 %228
    %230 = vadd.xlane.f32.xlu0 %v140
    %v231 = vpop.xlane.xlu0 %230
    %232 = vadd.xlane.f32.xlu0 %v143
    %v233 = vpop.xlane.xlu0 %232
    %234 = vadd.xlane.f32.xlu0 %v146
    %v235 = vpop.xlane.xlu0 %234
    %236 = vadd.xlane.f32.xlu0 %v149
    %v237 = vpop.xlane.xlu0 %236
    %238 = vadd.xlane.f32.xlu0 %v152
    %v239 = vpop.xlane.xlu0 %238
    %240 = vadd.xlane.f32.xlu0 %v155
    %v241 = vpop.xlane.xlu0 %240
    %242 = vadd.xlane.f32.xlu0 %v158
    %v243 = vpop.xlane.xlu0 %242
    %244 = vadd.xlane.f32.xlu0 %v161
    %v245 = vpop.xlane.xlu0 %244
    %246 = vadd.xlane.f32.xlu0 %v164
    %v247 = vpop.xlane.xlu0 %246
    %248 = vadd.xlane.f32.xlu0 %v167
    %v249 = vpop.xlane.xlu0 %248
    %250 = vadd.xlane.f32.xlu0 %v170
    %v251 = vpop.xlane.xlu0 %250
    %252 = vadd.xlane.f32.xlu0 %v173
    %v253 = vpop.xlane.xlu0 %252
    %254 = vadd.xlane.f32.xlu0 %v176
    %v255 = vpop.xlane.xlu0 %254
    %256 = vadd.xlane.f32.xlu0 %v179
    %v257 = vpop.xlane.xlu0 %256
    %258 = vadd.xlane.f32.xlu0 %v182
    %v259 = vpop.xlane.xlu0 %258
    %260 = vadd.xlane.f32.xlu0 %v185
    %v261 = vpop.xlane.xlu0 %260
    %262 = vadd.xlane.f32.xlu0 %v188
    %v263 = vpop.xlane.xlu0 %262
    %264 = vadd.xlane.f32.xlu0 %v191
    %v265 = vpop.xlane.xlu0 %264
    %266 = vadd.xlane.f32.xlu0 %v194
    %v267 = vpop.xlane.xlu0 %266
    %268 = vadd.xlane.f32.xlu0 %v197
    %v269 = vpop.xlane.xlu0 %268
    %270 = vadd.xlane.f32.xlu0 %v200
    %v271 = vpop.xlane.xlu0 %270
    %272 = vadd.xlane.f32.xlu0 %v203
    %v273 = vpop.xlane.xlu0 %272
    %274 = vadd.xlane.f32.xlu0 %v206
    %v275 = vpop.xlane.xlu0 %274
    %276 = vadd.xlane.f32.xlu0 %v209
    %v277 = vpop.xlane.xlu0 %276
    %278 = vadd.xlane.f32.xlu0 %v212
    %v279 = vpop.xlane.xlu0 %278
    %280 = vadd.xlane.f32.xlu0 %v215
    %v281 = vpop.xlane.xlu0 %280
    %282 = vadd.xlane.f32.xlu0 %v218
    %v283 = vpop.xlane.xlu0 %282
    %v284 = vmul.f32 %v221, 0.0078125
    %v285 = vmul.f32 %v223, 0.0078125
    %v286 = vmul.f32 %v225, 0.0078125
    %v287 = vmul.f32 %v227, 0.0078125
    %v288 = vmul.f32 %v229, 0.0078125
    %v289 = vmul.f32 %v231, 0.0078125
    %v290 = vmul.f32 %v233, 0.0078125
    %v291 = vmul.f32 %v235, 0.0078125
    %v292 = vmul.f32 %v237, 0.0078125
    %v293 = vmul.f32 %v239, 0.0078125
    %v294 = vmul.f32 %v241, 0.0078125
    %v295 = vmul.f32 %v243, 0.0078125
    %v296 = vmul.f32 %v245, 0.0078125
    %v297 = vmul.f32 %v247, 0.0078125
    %v298 = vmul.f32 %v249, 0.0078125
    %v299 = vmul.f32 %v251, 0.0078125
    %v300 = vmul.f32 %v253, 0.0078125
    %v301 = vmul.f32 %v255, 0.0078125
    %v302 = vmul.f32 %v257, 0.0078125
    %v303 = vmul.f32 %v259, 0.0078125
    %v304 = vmul.f32 %v261, 0.0078125
    %v305 = vmul.f32 %v263, 0.0078125
    %v306 = vmul.f32 %v265, 0.0078125
    %v307 = vmul.f32 %v267, 0.0078125
    %v308 = vmul.f32 %v269, 0.0078125
    %v309 = vmul.f32 %v271, 0.0078125
    %v310 = vmul.f32 %v273, 0.0078125
    %v311 = vmul.f32 %v275, 0.0078125
    %v312 = vmul.f32 %v277, 0.0078125
    %v313 = vmul.f32 %v279, 0.0078125
    %v314 = vmul.f32 %v281, 0.0078125
    %v315 = vmul.f32 %v283, 0.0078125
    %v316 = vmul.f32 %v125, %v125
    %v317 = vmul.f32 %v128, %v128
    %v318 = vmul.f32 %v131, %v131
    %v319 = vmul.f32 %v134, %v134
    %v320 = vmul.f32 %v137, %v137
    %v321 = vmul.f32 %v140, %v140
    %v322 = vmul.f32 %v143, %v143
    %v323 = vmul.f32 %v146, %v146
    %v324 = vmul.f32 %v149, %v149
    %v325 = vmul.f32 %v152, %v152
    %v326 = vmul.f32 %v155, %v155
    %v327 = vmul.f32 %v158, %v158
    %v328 = vmul.f32 %v161, %v161
    %v329 = vmul.f32 %v164, %v164
    %v330 = vmul.f32 %v167, %v167
    %v331 = vmul.f32 %v170, %v170
    %v332 = vmul.f32 %v173, %v173
    %v333 = vmul.f32 %v176, %v176
    %v334 = vmul.f32 %v179, %v179
    %v335 = vmul.f32 %v182, %v182
    %v336 = vmul.f32 %v185, %v185
    %v337 = vmul.f32 %v188, %v188
    %v338 = vmul.f32 %v191, %v191
    %v339 = vmul.f32 %v194, %v194
    %v340 = vmul.f32 %v197, %v197
    %v341 = vmul.f32 %v200, %v200
    %v342 = vmul.f32 %v203, %v203
    %v343 = vmul.f32 %v206, %v206
    %v344 = vmul.f32 %v209, %v209
    %v345 = vmul.f32 %v212, %v212
    %v346 = vmul.f32 %v215, %v215
    %v347 = vmul.f32 %v218, %v218
    %348 = vadd.xlane.f32.xlu0 %v316
    %v349 = vpop.xlane.xlu0 %348
    %350 = vadd.xlane.f32.xlu0 %v317
    %v351 = vpop.xlane.xlu0 %350
    %352 = vadd.xlane.f32.xlu0 %v318
    %v353 = vpop.xlane.xlu0 %352
    %354 = vadd.xlane.f32.xlu0 %v319
    %v355 = vpop.xlane.xlu0 %354
    %356 = vadd.xlane.f32.xlu0 %v320
    %v357 = vpop.xlane.xlu0 %356
    %358 = vadd.xlane.f32.xlu0 %v321
    %v359 = vpop.xlane.xlu0 %358
    %360 = vadd.xlane.f32.xlu0 %v322
    %v361 = vpop.xlane.xlu0 %360
    %362 = vadd.xlane.f32.xlu0 %v323
    %v363 = vpop.xlane.xlu0 %362
    %364 = vadd.xlane.f32.xlu0 %v324
    %v365 = vpop.xlane.xlu0 %364
    %366 = vadd.xlane.f32.xlu0 %v325
    %v367 = vpop.xlane.xlu0 %366
    %368 = vadd.xlane.f32.xlu0 %v326
    %v369 = vpop.xlane.xlu0 %368
    %370 = vadd.xlane.f32.xlu0 %v327
    %v371 = vpop.xlane.xlu0 %370
    %372 = vadd.xlane.f32.xlu0 %v328
    %v373 = vpop.xlane.xlu0 %372
    %374 = vadd.xlane.f32.xlu0 %v329
    %v375 = vpop.xlane.xlu0 %374
    %376 = vadd.xlane.f32.xlu0 %v330
    %v377 = vpop.xlane.xlu0 %376
    %378 = vadd.xlane.f32.xlu0 %v331
    %v379 = vpop.xlane.xlu0 %378
    %380 = vadd.xlane.f32.xlu0 %v332
    %v381 = vpop.xlane.xlu0 %380
    %382 = vadd.xlane.f32.xlu0 %v333
    %v383 = vpop.xlane.xlu0 %382
    %384 = vadd.xlane.f32.xlu0 %v334
    %v385 = vpop.xlane.xlu0 %384
    %386 = vadd.xlane.f32.xlu0 %v335
    %v387 = vpop.xlane.xlu0 %386
    %388 = vadd.xlane.f32.xlu0 %v336
    %v389 = vpop.xlane.xlu0 %388
    %390 = vadd.xlane.f32.xlu0 %v337
    %v391 = vpop.xlane.xlu0 %390
    %392 = vadd.xlane.f32.xlu0 %v338
    %v393 = vpop.xlane.xlu0 %392
    %394 = vadd.xlane.f32.xlu0 %v339
    %v395 = vpop.xlane.xlu0 %394
    %396 = vadd.xlane.f32.xlu0 %v340
    %v397 = vpop.xlane.xlu0 %396
    %398 = vadd.xlane.f32.xlu0 %v341
    %v399 = vpop.xlane.xlu0 %398
    %400 = vadd.xlane.f32.xlu0 %v342
    %v401 = vpop.xlane.xlu0 %400
    %402 = vadd.xlane.f32.xlu0 %v343
    %v403 = vpop.xlane.xlu0 %402
    %404 = vadd.xlane.f32.xlu0 %v344
    %v405 = vpop.xlane.xlu0 %404
    %406 = vadd.xlane.f32.xlu0 %v345
    %v407 = vpop.xlane.xlu0 %406
    %408 = vadd.xlane.f32.xlu0 %v346
    %v409 = vpop.xlane.xlu0 %408
    %410 = vadd.xlane.f32.xlu0 %v347
    %v411 = vpop.xlane.xlu0 %410
    %v412 = vmul.f32 %v349, 0.0078125
    %v413 = vmul.f32 %v351, 0.0078125
    %v414 = vmul.f32 %v353, 0.0078125
    %v415 = vmul.f32 %v355, 0.0078125
    %v416 = vmul.f32 %v357, 0.0078125
    %v417 = vmul.f32 %v359, 0.0078125
    %v418 = vmul.f32 %v361, 0.0078125
    %v419 = vmul.f32 %v363, 0.0078125
    %v420 = vmul.f32 %v365, 0.0078125
    %v421 = vmul.f32 %v367, 0.0078125
    %v422 = vmul.f32 %v369, 0.0078125
    %v423 = vmul.f32 %v371, 0.0078125
    %v424 = vmul.f32 %v373, 0.0078125
    %v425 = vmul.f32 %v375, 0.0078125
    %v426 = vmul.f32 %v377, 0.0078125
    %v427 = vmul.f32 %v379, 0.0078125
    %v428 = vmul.f32 %v381, 0.0078125
    %v429 = vmul.f32 %v383, 0.0078125
    %v430 = vmul.f32 %v385, 0.0078125
    %v431 = vmul.f32 %v387, 0.0078125
    %v432 = vmul.f32 %v389, 0.0078125
    %v433 = vmul.f32 %v391, 0.0078125
    %v434 = vmul.f32 %v393, 0.0078125
    %v435 = vmul.f32 %v395, 0.0078125
    %v436 = vmul.f32 %v397, 0.0078125
    %v437 = vmul.f32 %v399, 0.0078125
    %v438 = vmul.f32 %v401, 0.0078125
    %v439 = vmul.f32 %v403, 0.0078125
    %v440 = vmul.f32 %v405, 0.0078125
    %v441 = vmul.f32 %v407, 0.0078125
    %v442 = vmul.f32 %v409, 0.0078125
    %v443 = vmul.f32 %v411, 0.0078125
    %v444 = vmul.f32 %v284, %v284
    %v445 = vmul.f32 %v285, %v285
    %v446 = vmul.f32 %v286, %v286
    %v447 = vmul.f32 %v287, %v287
    %v448 = vmul.f32 %v288, %v288
    %v449 = vmul.f32 %v289, %v289
    %v450 = vmul.f32 %v290, %v290
    %v451 = vmul.f32 %v291, %v291
    %v452 = vmul.f32 %v292, %v292
    %v453 = vmul.f32 %v293, %v293
    %v454 = vmul.f32 %v294, %v294
    %v455 = vmul.f32 %v295, %v295
    %v456 = vmul.f32 %v296, %v296
    %v457 = vmul.f32 %v297, %v297
    %v458 = vmul.f32 %v298, %v298
    %v459 = vmul.f32 %v299, %v299
    %v460 = vmul.f32 %v300, %v300
    %v461 = vmul.f32 %v301, %v301
    %v462 = vmul.f32 %v302, %v302
    %v463 = vmul.f32 %v303, %v303
    %v464 = vmul.f32 %v304, %v304
    %v465 = vmul.f32 %v305, %v305
    %v466 = vmul.f32 %v306, %v306
    %v467 = vmul.f32 %v307, %v307
    %v468 = vmul.f32 %v308, %v308
    %v469 = vmul.f32 %v309, %v309
    %v470 = vmul.f32 %v310, %v310
    %v471 = vmul.f32 %v311, %v311
    %v472 = vmul.f32 %v312, %v312
    %v473 = vmul.f32 %v313, %v313
    %v474 = vmul.f32 %v314, %v314
    %v475 = vmul.f32 %v315, %v315
    %v476 = vsub.f32 %v412, %v444
    %v477 = vsub.f32 %v413, %v445
    %v478 = vsub.f32 %v414, %v446
    %v479 = vsub.f32 %v415, %v447
    %v480 = vsub.f32 %v416, %v448
    %v481 = vsub.f32 %v417, %v449
    %v482 = vsub.f32 %v418, %v450
    %v483 = vsub.f32 %v419, %v451
    %v484 = vsub.f32 %v420, %v452
    %v485 = vsub.f32 %v421, %v453
    %v486 = vsub.f32 %v422, %v454
    %v487 = vsub.f32 %v423, %v455
    %v488 = vsub.f32 %v424, %v456
    %v489 = vsub.f32 %v425, %v457
    %v490 = vsub.f32 %v426, %v458
    %v491 = vsub.f32 %v427, %v459
    %v492 = vsub.f32 %v428, %v460
    %v493 = vsub.f32 %v429, %v461
    %v494 = vsub.f32 %v430, %v462
    %v495 = vsub.f32 %v431, %v463
    %v496 = vsub.f32 %v432, %v464
    %v497 = vsub.f32 %v433, %v465
    %v498 = vsub.f32 %v434, %v466
    %v499 = vsub.f32 %v435, %v467
    %v500 = vsub.f32 %v436, %v468
    %v501 = vsub.f32 %v437, %v469
    %v502 = vsub.f32 %v438, %v470
    %v503 = vsub.f32 %v439, %v471
    %v504 = vsub.f32 %v440, %v472
    %v505 = vsub.f32 %v441, %v473
    %v506 = vsub.f32 %v442, %v474
    %v507 = vsub.f32 %v443, %v475
    %v508 = vmax.f32 %v476, 0.0
    %v509 = vmax.f32 %v477, 0.0
    %v510 = vmax.f32 %v478, 0.0
    %v511 = vmax.f32 %v479, 0.0
    %v512 = vmax.f32 %v480, 0.0
    %v513 = vmax.f32 %v481, 0.0
    %v514 = vmax.f32 %v482, 0.0
    %v515 = vmax.f32 %v483, 0.0
    %v516 = vmax.f32 %v484, 0.0
    %v517 = vmax.f32 %v485, 0.0
    %v518 = vmax.f32 %v486, 0.0
    %v519 = vmax.f32 %v487, 0.0
    %v520 = vmax.f32 %v488, 0.0
    %v521 = vmax.f32 %v489, 0.0
    %v522 = vmax.f32 %v490, 0.0
    %v523 = vmax.f32 %v491, 0.0
    %v524 = vmax.f32 %v492, 0.0
    %v525 = vmax.f32 %v493, 0.0
    %v526 = vmax.f32 %v494, 0.0
    %v527 = vmax.f32 %v495, 0.0
    %v528 = vmax.f32 %v496, 0.0
    %v529 = vmax.f32 %v497, 0.0
    %v530 = vmax.f32 %v498, 0.0
    %v531 = vmax.f32 %v499, 0.0
    %v532 = vmax.f32 %v500, 0.0
    %v533 = vmax.f32 %v501, 0.0
    %v534 = vmax.f32 %v502, 0.0
    %v535 = vmax.f32 %v503, 0.0
    %v536 = vmax.f32 %v504, 0.0
    %v537 = vmax.f32 %v505, 0.0
    %v538 = vmax.f32 %v506, 0.0
    %v539 = vmax.f32 %v507, 0.0
    %v540 = vsub.f32 %v125, %v284
    %v541 = vsub.f32 %v128, %v285
    %v542 = vsub.f32 %v131, %v286
    %v543 = vsub.f32 %v134, %v287
    %v544 = vsub.f32 %v137, %v288
    %v545 = vsub.f32 %v140, %v289
    %v546 = vsub.f32 %v143, %v290
    %v547 = vsub.f32 %v146, %v291
    %v548 = vsub.f32 %v149, %v292
    %v549 = vsub.f32 %v152, %v293
    %v550 = vsub.f32 %v155, %v294
    %v551 = vsub.f32 %v158, %v295
    %v552 = vsub.f32 %v161, %v296
    %v553 = vsub.f32 %v164, %v297
    %v554 = vsub.f32 %v167, %v298
    %v555 = vsub.f32 %v170, %v299
    %v556 = vsub.f32 %v173, %v300
    %v557 = vsub.f32 %v176, %v301
    %v558 = vsub.f32 %v179, %v302
    %v559 = vsub.f32 %v182, %v303
    %v560 = vsub.f32 %v185, %v304
    %v561 = vsub.f32 %v188, %v305
    %v562 = vsub.f32 %v191, %v306
    %v563 = vsub.f32 %v194, %v307
    %v564 = vsub.f32 %v197, %v308
    %v565 = vsub.f32 %v200, %v309
    %v566 = vsub.f32 %v203, %v310
    %v567 = vsub.f32 %v206, %v311
    %v568 = vsub.f32 %v209, %v312
    %v569 = vsub.f32 %v212, %v313
    %v570 = vsub.f32 %v215, %v314
    %v571 = vsub.f32 %v218, %v315
    %v572 = vadd.f32 %v508, 1e-05
    %v573 = vadd.f32 %v509, 1e-05
    %v574 = vadd.f32 %v510, 1e-05
    %v575 = vadd.f32 %v511, 1e-05
    %v576 = vadd.f32 %v512, 1e-05
    %v577 = vadd.f32 %v513, 1e-05
    %v578 = vadd.f32 %v514, 1e-05
    %v579 = vadd.f32 %v515, 1e-05
    %v580 = vadd.f32 %v516, 1e-05
    %v581 = vadd.f32 %v517, 1e-05
    %v582 = vadd.f32 %v518, 1e-05
    %v583 = vadd.f32 %v519, 1e-05
    %v584 = vadd.f32 %v520, 1e-05
    %v585 = vadd.f32 %v521, 1e-05
    %v586 = vadd.f32 %v522, 1e-05
    %v587 = vadd.f32 %v523, 1e-05
    %v588 = vadd.f32 %v524, 1e-05
    %v589 = vadd.f32 %v525, 1e-05
    %v590 = vadd.f32 %v526, 1e-05
    %v591 = vadd.f32 %v527, 1e-05
    %v592 = vadd.f32 %v528, 1e-05
    %v593 = vadd.f32 %v529, 1e-05
    %v594 = vadd.f32 %v530, 1e-05
    %v595 = vadd.f32 %v531, 1e-05
    %v596 = vadd.f32 %v532, 1e-05
    %v597 = vadd.f32 %v533, 1e-05
    %v598 = vadd.f32 %v534, 1e-05
    %v599 = vadd.f32 %v535, 1e-05
    %v600 = vadd.f32 %v536, 1e-05
    %v601 = vadd.f32 %v537, 1e-05
    %v602 = vadd.f32 %v538, 1e-05
    %v603 = vadd.f32 %v539, 1e-05
    %v604 = vrsqrt.pop %v572
    %v605 = vmul.f32 %v604, %v572
    %v606 = vmul.f32 %v605, %v604
    %v607 = vmul.f32 0.5, %v606
    %v608 = vsub.f32 1.5, %v607
    %v609 = vmul.f32 %v604, %v608
    %vm610 = vweird.f32 %v572
    %vm611 = vweird.f32 %v604
    %vm612 = vmor %vm610, %vm611
    %v613 = vsel %vm612, %v604, %v609
    %v614 = vrsqrt.pop %v573
    %v615 = vmul.f32 %v614, %v573
    %v616 = vmul.f32 %v615, %v614
    %v617 = vmul.f32 0.5, %v616
    %v618 = vsub.f32 1.5, %v617
    %v619 = vmul.f32 %v614, %v618
    %vm620 = vweird.f32 %v573
    %vm621 = vweird.f32 %v614
    %vm622 = vmor %vm620, %vm621
    %v623 = vsel %vm622, %v614, %v619
    %v624 = vrsqrt.pop %v574
    %v625 = vmul.f32 %v624, %v574
    %v626 = vmul.f32 %v625, %v624
    %v627 = vmul.f32 0.5, %v626
    %v628 = vsub.f32 1.5, %v627
    %v629 = vmul.f32 %v624, %v628
    %vm630 = vweird.f32 %v574
    %vm631 = vweird.f32 %v624
    %vm632 = vmor %vm630, %vm631
    %v633 = vsel %vm632, %v624, %v629
    %v634 = vrsqrt.pop %v575
    %v635 = vmul.f32 %v634, %v575
    %v636 = vmul.f32 %v635, %v634
    %v637 = vmul.f32 0.5, %v636
    %v638 = vsub.f32 1.5, %v637
    %v639 = vmul.f32 %v634, %v638
    %vm640 = vweird.f32 %v575
    %vm641 = vweird.f32 %v634
    %vm642 = vmor %vm640, %vm641
    %v643 = vsel %vm642, %v634, %v639
    %v644 = vrsqrt.pop %v576
    %v645 = vmul.f32 %v644, %v576
    %v646 = vmul.f32 %v645, %v644
    %v647 = vmul.f32 0.5, %v646
    %v648 = vsub.f32 1.5, %v647
    %v649 = vmul.f32 %v644, %v648
    %vm650 = vweird.f32 %v576
    %vm651 = vweird.f32 %v644
    %vm652 = vmor %vm650, %vm651
    %v653 = vsel %vm652, %v644, %v649
    %v654 = vrsqrt.pop %v577
    %v655 = vmul.f32 %v654, %v577
    %v656 = vmul.f32 %v655, %v654
    %v657 = vmul.f32 0.5, %v656
    %v658 = vsub.f32 1.5, %v657
    %v659 = vmul.f32 %v654, %v658
    %vm660 = vweird.f32 %v577
    %vm661 = vweird.f32 %v654
    %vm662 = vmor %vm660, %vm661
    %v663 = vsel %vm662, %v654, %v659
    %v664 = vrsqrt.pop %v578
    %v665 = vmul.f32 %v664, %v578
    %v666 = vmul.f32 %v665, %v664
    %v667 = vmul.f32 0.5, %v666
    %v668 = vsub.f32 1.5, %v667
    %v669 = vmul.f32 %v664, %v668
    %vm670 = vweird.f32 %v578
    %vm671 = vweird.f32 %v664
    %vm672 = vmor %vm670, %vm671
    %v673 = vsel %vm672, %v664, %v669
    %v674 = vrsqrt.pop %v579
    %v675 = vmul.f32 %v674, %v579
    %v676 = vmul.f32 %v675, %v674
    %v677 = vmul.f32 0.5, %v676
    %v678 = vsub.f32 1.5, %v677
    %v679 = vmul.f32 %v674, %v678
    %vm680 = vweird.f32 %v579
    %vm681 = vweird.f32 %v674
    %vm682 = vmor %vm680, %vm681
    %v683 = vsel %vm682, %v674, %v679
    %v684 = vrsqrt.pop %v580
    %v685 = vmul.f32 %v684, %v580
    %v686 = vmul.f32 %v685, %v684
    %v687 = vmul.f32 0.5, %v686
    %v688 = vsub.f32 1.5, %v687
    %v689 = vmul.f32 %v684, %v688
    %vm690 = vweird.f32 %v580
    %vm691 = vweird.f32 %v684
    %vm692 = vmor %vm690, %vm691
    %v693 = vsel %vm692, %v684, %v689
    %v694 = vrsqrt.pop %v581
    %v695 = vmul.f32 %v694, %v581
    %v696 = vmul.f32 %v695, %v694
    %v697 = vmul.f32 0.5, %v696
    %v698 = vsub.f32 1.5, %v697
    %v699 = vmul.f32 %v694, %v698
    %vm700 = vweird.f32 %v581
    %vm701 = vweird.f32 %v694
    %vm702 = vmor %vm700, %vm701
    %v703 = vsel %vm702, %v694, %v699
    %v704 = vrsqrt.pop %v582
    %v705 = vmul.f32 %v704, %v582
    %v706 = vmul.f32 %v705, %v704
    %v707 = vmul.f32 0.5, %v706
    %v708 = vsub.f32 1.5, %v707
    %v709 = vmul.f32 %v704, %v708
    %vm710 = vweird.f32 %v582
    %vm711 = vweird.f32 %v704
    %vm712 = vmor %vm710, %vm711
    %v713 = vsel %vm712, %v704, %v709
    %v714 = vrsqrt.pop %v583
    %v715 = vmul.f32 %v714, %v583
    %v716 = vmul.f32 %v715, %v714
    %v717 = vmul.f32 0.5, %v716
    %v718 = vsub.f32 1.5, %v717
    %v719 = vmul.f32 %v714, %v718
    %vm720 = vweird.f32 %v583
    %vm721 = vweird.f32 %v714
    %vm722 = vmor %vm720, %vm721
    %v723 = vsel %vm722, %v714, %v719
    %v724 = vrsqrt.pop %v584
    %v725 = vmul.f32 %v724, %v584
    %v726 = vmul.f32 %v725, %v724
    %v727 = vmul.f32 0.5, %v726
    %v728 = vsub.f32 1.5, %v727
    %v729 = vmul.f32 %v724, %v728
    %vm730 = vweird.f32 %v584
    %vm731 = vweird.f32 %v724
    %vm732 = vmor %vm730, %vm731
    %v733 = vsel %vm732, %v724, %v729
    %v734 = vrsqrt.pop %v585
    %v735 = vmul.f32 %v734, %v585
    %v736 = vmul.f32 %v735, %v734
    %v737 = vmul.f32 0.5, %v736
    %v738 = vsub.f32 1.5, %v737
    %v739 = vmul.f32 %v734, %v738
    %vm740 = vweird.f32 %v585
    %vm741 = vweird.f32 %v734
    %vm742 = vmor %vm740, %vm741
    %v743 = vsel %vm742, %v734, %v739
    %v744 = vrsqrt.pop %v586
    %v745 = vmul.f32 %v744, %v586
    %v746 = vmul.f32 %v745, %v744
    %v747 = vmul.f32 0.5, %v746
    %v748 = vsub.f32 1.5, %v747
    %v749 = vmul.f32 %v744, %v748
    %vm750 = vweird.f32 %v586
    %vm751 = vweird.f32 %v744
    %vm752 = vmor %vm750, %vm751
    %v753 = vsel %vm752, %v744, %v749
    %v754 = vrsqrt.pop %v587
    %v755 = vmul.f32 %v754, %v587
    %v756 = vmul.f32 %v755, %v754
    %v757 = vmul.f32 0.5, %v756
    %v758 = vsub.f32 1.5, %v757
    %v759 = vmul.f32 %v754, %v758
    %vm760 = vweird.f32 %v587
    %vm761 = vweird.f32 %v754
    %vm762 = vmor %vm760, %vm761
    %v763 = vsel %vm762, %v754, %v759
    %v764 = vrsqrt.pop %v588
    %v765 = vmul.f32 %v764, %v588
    %v766 = vmul.f32 %v765, %v764
    %v767 = vmul.f32 0.5, %v766
    %v768 = vsub.f32 1.5, %v767
    %v769 = vmul.f32 %v764, %v768
    %vm770 = vweird.f32 %v588
    %vm771 = vweird.f32 %v764
    %vm772 = vmor %vm770, %vm771
    %v773 = vsel %vm772, %v764, %v769
    %v774 = vrsqrt.pop %v589
    %v775 = vmul.f32 %v774, %v589
    %v776 = vmul.f32 %v775, %v774
    %v777 = vmul.f32 0.5, %v776
    %v778 = vsub.f32 1.5, %v777
    %v779 = vmul.f32 %v774, %v778
    %vm780 = vweird.f32 %v589
    %vm781 = vweird.f32 %v774
    %vm782 = vmor %vm780, %vm781
    %v783 = vsel %vm782, %v774, %v779
    %v784 = vrsqrt.pop %v590
    %v785 = vmul.f32 %v784, %v590
    %v786 = vmul.f32 %v785, %v784
    %v787 = vmul.f32 0.5, %v786
    %v788 = vsub.f32 1.5, %v787
    %v789 = vmul.f32 %v784, %v788
    %vm790 = vweird.f32 %v590
    %vm791 = vweird.f32 %v784
    %vm792 = vmor %vm790, %vm791
    %v793 = vsel %vm792, %v784, %v789
    %v794 = vrsqrt.pop %v591
    %v795 = vmul.f32 %v794, %v591
    %v796 = vmul.f32 %v795, %v794
    %v797 = vmul.f32 0.5, %v796
    %v798 = vsub.f32 1.5, %v797
    %v799 = vmul.f32 %v794, %v798
    %vm800 = vweird.f32 %v591
    %vm801 = vweird.f32 %v794
    %vm802 = vmor %vm800, %vm801
    %v803 = vsel %vm802, %v794, %v799
    %v804 = vrsqrt.pop %v592
    %v805 = vmul.f32 %v804, %v592
    %v806 = vmul.f32 %v805, %v804
    %v807 = vmul.f32 0.5, %v806
    %v808 = vsub.f32 1.5, %v807
    %v809 = vmul.f32 %v804, %v808
    %vm810 = vweird.f32 %v592
    %vm811 = vweird.f32 %v804
    %vm812 = vmor %vm810, %vm811
    %v813 = vsel %vm812, %v804, %v809
    %v814 = vrsqrt.pop %v593
    %v815 = vmul.f32 %v814, %v593
    %v816 = vmul.f32 %v815, %v814
    %v817 = vmul.f32 0.5, %v816
    %v818 = vsub.f32 1.5, %v817
    %v819 = vmul.f32 %v814, %v818
    %vm820 = vweird.f32 %v593
    %vm821 = vweird.f32 %v814
    %vm822 = vmor %vm820, %vm821
    %v823 = vsel %vm822, %v814, %v819
    %v824 = vrsqrt.pop %v594
    %v825 = vmul.f32 %v824, %v594
    %v826 = vmul.f32 %v825, %v824
    %v827 = vmul.f32 0.5, %v826
    %v828 = vsub.f32 1.5, %v827
    %v829 = vmul.f32 %v824, %v828
    %vm830 = vweird.f32 %v594
    %vm831 = vweird.f32 %v824
    %vm832 = vmor %vm830, %vm831
    %v833 = vsel %vm832, %v824, %v829
    %v834 = vrsqrt.pop %v595
    %v835 = vmul.f32 %v834, %v595
    %v836 = vmul.f32 %v835, %v834
    %v837 = vmul.f32 0.5, %v836
    %v838 = vsub.f32 1.5, %v837
    %v839 = vmul.f32 %v834, %v838
    %vm840 = vweird.f32 %v595
    %vm841 = vweird.f32 %v834
    %vm842 = vmor %vm840, %vm841
    %v843 = vsel %vm842, %v834, %v839
    %v844 = vrsqrt.pop %v596
    %v845 = vmul.f32 %v844, %v596
    %v846 = vmul.f32 %v845, %v844
    %v847 = vmul.f32 0.5, %v846
    %v848 = vsub.f32 1.5, %v847
    %v849 = vmul.f32 %v844, %v848
    %vm850 = vweird.f32 %v596
    %vm851 = vweird.f32 %v844
    %vm852 = vmor %vm850, %vm851
    %v853 = vsel %vm852, %v844, %v849
    %v854 = vrsqrt.pop %v597
    %v855 = vmul.f32 %v854, %v597
    %v856 = vmul.f32 %v855, %v854
    %v857 = vmul.f32 0.5, %v856
    %v858 = vsub.f32 1.5, %v857
    %v859 = vmul.f32 %v854, %v858
    %vm860 = vweird.f32 %v597
    %vm861 = vweird.f32 %v854
    %vm862 = vmor %vm860, %vm861
    %v863 = vsel %vm862, %v854, %v859
    %v864 = vrsqrt.pop %v598
    %v865 = vmul.f32 %v864, %v598
    %v866 = vmul.f32 %v865, %v864
    %v867 = vmul.f32 0.5, %v866
    %v868 = vsub.f32 1.5, %v867
    %v869 = vmul.f32 %v864, %v868
    %vm870 = vweird.f32 %v598
    %vm871 = vweird.f32 %v864
    %vm872 = vmor %vm870, %vm871
    %v873 = vsel %vm872, %v864, %v869
    %v874 = vrsqrt.pop %v599
    %v875 = vmul.f32 %v874, %v599
    %v876 = vmul.f32 %v875, %v874
    %v877 = vmul.f32 0.5, %v876
    %v878 = vsub.f32 1.5, %v877
    %v879 = vmul.f32 %v874, %v878
    %vm880 = vweird.f32 %v599
    %vm881 = vweird.f32 %v874
    %vm882 = vmor %vm880, %vm881
    %v883 = vsel %vm882, %v874, %v879
    %v884 = vrsqrt.pop %v600
    %v885 = vmul.f32 %v884, %v600
    %v886 = vmul.f32 %v885, %v884
    %v887 = vmul.f32 0.5, %v886
    %v888 = vsub.f32 1.5, %v887
    %v889 = vmul.f32 %v884, %v888
    %vm890 = vweird.f32 %v600
    %vm891 = vweird.f32 %v884
    %vm892 = vmor %vm890, %vm891
    %v893 = vsel %vm892, %v884, %v889
    %v894 = vrsqrt.pop %v601
    %v895 = vmul.f32 %v894, %v601
    %v896 = vmul.f32 %v895, %v894
    %v897 = vmul.f32 0.5, %v896
    %v898 = vsub.f32 1.5, %v897
    %v899 = vmul.f32 %v894, %v898
    %vm900 = vweird.f32 %v601
    %vm901 = vweird.f32 %v894
    %vm902 = vmor %vm900, %vm901
    %v903 = vsel %vm902, %v894, %v899
    %v904 = vrsqrt.pop %v602
    %v905 = vmul.f32 %v904, %v602
    %v906 = vmul.f32 %v905, %v904
    %v907 = vmul.f32 0.5, %v906
    %v908 = vsub.f32 1.5, %v907
    %v909 = vmul.f32 %v904, %v908
    %vm910 = vweird.f32 %v602
    %vm911 = vweird.f32 %v904
    %vm912 = vmor %vm910, %vm911
    %v913 = vsel %vm912, %v904, %v909
    %v914 = vrsqrt.pop %v603
    %v915 = vmul.f32 %v914, %v603
    %v916 = vmul.f32 %v915, %v914
    %v917 = vmul.f32 0.5, %v916
    %v918 = vsub.f32 1.5, %v917
    %v919 = vmul.f32 %v914, %v918
    %vm920 = vweird.f32 %v603
    %vm921 = vweird.f32 %v914
    %vm922 = vmor %vm920, %vm921
    %v923 = vsel %vm922, %v914, %v919
    %v924 = vmul.f32 %v540, %v613
    %v925 = vmul.f32 %v541, %v623
    %v926 = vmul.f32 %v542, %v633
    %v927 = vmul.f32 %v543, %v643
    %v928 = vmul.f32 %v544, %v653
    %v929 = vmul.f32 %v545, %v663
    %v930 = vmul.f32 %v546, %v673
    %v931 = vmul.f32 %v547, %v683
    %v932 = vmul.f32 %v548, %v693
    %v933 = vmul.f32 %v549, %v703
    %v934 = vmul.f32 %v550, %v713
    %v935 = vmul.f32 %v551, %v723
    %v936 = vmul.f32 %v552, %v733
    %v937 = vmul.f32 %v553, %v743
    %v938 = vmul.f32 %v554, %v753
    %v939 = vmul.f32 %v555, %v763
    %v940 = vmul.f32 %v556, %v773
    %v941 = vmul.f32 %v557, %v783
    %v942 = vmul.f32 %v558, %v793
    %v943 = vmul.f32 %v559, %v803
    %v944 = vmul.f32 %v560, %v813
    %v945 = vmul.f32 %v561, %v823
    %v946 = vmul.f32 %v562, %v833
    %v947 = vmul.f32 %v563, %v843
    %v948 = vmul.f32 %v564, %v853
    %v949 = vmul.f32 %v565, %v863
    %v950 = vmul.f32 %v566, %v873
    %v951 = vmul.f32 %v567, %v883
    %v952 = vmul.f32 %v568, %v893
    %v953 = vmul.f32 %v569, %v903
    %v954 = vmul.f32 %v570, %v913
    %v955 = vmul.f32 %v571, %v923
    %v956 = vld [vmem:[%s4] sm:$0x1]
    %v958 = vperm.slane %v956, 0
    %v960 = vmul.f32 %v924, %v958
    %v961 = vmul.f32 %v925, %v958
    %v962 = vmul.f32 %v926, %v958
    %v963 = vmul.f32 %v927, %v958
    %v964 = vmul.f32 %v928, %v958
    %v965 = vmul.f32 %v929, %v958
    %v966 = vmul.f32 %v930, %v958
    %v967 = vmul.f32 %v931, %v958
    %v968 = vmul.f32 %v932, %v958
    %v969 = vmul.f32 %v933, %v958
    %v970 = vmul.f32 %v934, %v958
    %v971 = vmul.f32 %v935, %v958
    %v972 = vmul.f32 %v936, %v958
    %v973 = vmul.f32 %v937, %v958
    %v974 = vmul.f32 %v938, %v958
    %v975 = vmul.f32 %v939, %v958
    %v976 = vmul.f32 %v940, %v958
    %v977 = vmul.f32 %v941, %v958
    %v978 = vmul.f32 %v942, %v958
    %v979 = vmul.f32 %v943, %v958
    %v980 = vmul.f32 %v944, %v958
    %v981 = vmul.f32 %v945, %v958
    %v982 = vmul.f32 %v946, %v958
    %v983 = vmul.f32 %v947, %v958
    %v984 = vmul.f32 %v948, %v958
    %v985 = vmul.f32 %v949, %v958
    %v986 = vmul.f32 %v950, %v958
    %v987 = vmul.f32 %v951, %v958
    %v988 = vmul.f32 %v952, %v958
    %v989 = vmul.f32 %v953, %v958
    %v990 = vmul.f32 %v954, %v958
    %v991 = vmul.f32 %v955, %v958
    %v992 = vld [vmem:[%s5] sm:$0x1]
    %v994 = vperm.slane %v992, 0
    %v996 = vadd.f32 %v960, %v994
    %v997 = vadd.f32 %v961, %v994
    %v998 = vadd.f32 %v962, %v994
    %v999 = vadd.f32 %v963, %v994
    %v1000 = vadd.f32 %v964, %v994
    %v1001 = vadd.f32 %v965, %v994
    %v1002 = vadd.f32 %v966, %v994
    %v1003 = vadd.f32 %v967, %v994
    %v1004 = vadd.f32 %v968, %v994
    %v1005 = vadd.f32 %v969, %v994
    %v1006 = vadd.f32 %v970, %v994
    %v1007 = vadd.f32 %v971, %v994
    %v1008 = vadd.f32 %v972, %v994
    %v1009 = vadd.f32 %v973, %v994
    %v1010 = vadd.f32 %v974, %v994
    %v1011 = vadd.f32 %v975, %v994
    %v1012 = vadd.f32 %v976, %v994
    %v1013 = vadd.f32 %v977, %v994
    %v1014 = vadd.f32 %v978, %v994
    %v1015 = vadd.f32 %v979, %v994
    %v1016 = vadd.f32 %v980, %v994
    %v1017 = vadd.f32 %v981, %v994
    %v1018 = vadd.f32 %v982, %v994
    %v1019 = vadd.f32 %v983, %v994
    %v1020 = vadd.f32 %v984, %v994
    %v1021 = vadd.f32 %v985, %v994
    %v1022 = vadd.f32 %v986, %v994
    %v1023 = vadd.f32 %v987, %v994
    %v1024 = vadd.f32 %v988, %v994
    %v1025 = vadd.f32 %v989, %v994
    %v1026 = vadd.f32 %v990, %v994
    %v1027 = vadd.f32 %v991, %v994
    %vm1028 = vcmp.ge.f32.partialorder %v996, 0.0
    %vm1029 = vcmp.ge.f32.partialorder %v997, 0.0
    %vm1030 = vcmp.ge.f32.partialorder %v998, 0.0
    %vm1031 = vcmp.ge.f32.partialorder %v999, 0.0
    %vm1032 = vcmp.ge.f32.partialorder %v1000, 0.0
    %vm1033 = vcmp.ge.f32.partialorder %v1001, 0.0
    %vm1034 = vcmp.ge.f32.partialorder %v1002, 0.0
    %vm1035 = vcmp.ge.f32.partialorder %v1003, 0.0
    %vm1036 = vcmp.ge.f32.partialorder %v1004, 0.0
    %vm1037 = vcmp.ge.f32.partialorder %v1005, 0.0
    %vm1038 = vcmp.ge.f32.partialorder %v1006, 0.0
    %vm1039 = vcmp.ge.f32.partialorder %v1007, 0.0
    %vm1040 = vcmp.ge.f32.partialorder %v1008, 0.0
    %vm1041 = vcmp.ge.f32.partialorder %v1009, 0.0
    %vm1042 = vcmp.ge.f32.partialorder %v1010, 0.0
    %vm1043 = vcmp.ge.f32.partialorder %v1011, 0.0
    %vm1044 = vcmp.ge.f32.partialorder %v1012, 0.0
    %vm1045 = vcmp.ge.f32.partialorder %v1013, 0.0
    %vm1046 = vcmp.ge.f32.partialorder %v1014, 0.0
    %vm1047 = vcmp.ge.f32.partialorder %v1015, 0.0
    %vm1048 = vcmp.ge.f32.partialorder %v1016, 0.0
    %vm1049 = vcmp.ge.f32.partialorder %v1017, 0.0
    %vm1050 = vcmp.ge.f32.partialorder %v1018, 0.0
    %vm1051 = vcmp.ge.f32.partialorder %v1019, 0.0
    %vm1052 = vcmp.ge.f32.partialorder %v1020, 0.0
    %vm1053 = vcmp.ge.f32.partialorder %v1021, 0.0
    %vm1054 = vcmp.ge.f32.partialorder %v1022, 0.0
    %vm1055 = vcmp.ge.f32.partialorder %v1023, 0.0
    %vm1056 = vcmp.ge.f32.partialorder %v1024, 0.0
    %vm1057 = vcmp.ge.f32.partialorder %v1025, 0.0
    %vm1058 = vcmp.ge.f32.partialorder %v1026, 0.0
    %vm1059 = vcmp.ge.f32.partialorder %v1027, 0.0
    %v1060 = vmul.f32 %v996, 0.1
    %v1061 = vmul.f32 %v997, 0.1
    %v1062 = vmul.f32 %v998, 0.1
    %v1063 = vmul.f32 %v999, 0.1
    %v1064 = vmul.f32 %v1000, 0.1
    %v1065 = vmul.f32 %v1001, 0.1
    %v1066 = vmul.f32 %v1002, 0.1
    %v1067 = vmul.f32 %v1003, 0.1
    %v1068 = vmul.f32 %v1004, 0.1
    %v1069 = vmul.f32 %v1005, 0.1
    %v1070 = vmul.f32 %v1006, 0.1
    %v1071 = vmul.f32 %v1007, 0.1
    %v1072 = vmul.f32 %v1008, 0.1
    %v1073 = vmul.f32 %v1009, 0.1
    %v1074 = vmul.f32 %v1010, 0.1
    %v1075 = vmul.f32 %v1011, 0.1
    %v1076 = vmul.f32 %v1012, 0.1
    %v1077 = vmul.f32 %v1013, 0.1
    %v1078 = vmul.f32 %v1014, 0.1
    %v1079 = vmul.f32 %v1015, 0.1
    %v1080 = vmul.f32 %v1016, 0.1
    %v1081 = vmul.f32 %v1017, 0.1
    %v1082 = vmul.f32 %v1018, 0.1
    %v1083 = vmul.f32 %v1019, 0.1
    %v1084 = vmul.f32 %v1020, 0.1
    %v1085 = vmul.f32 %v1021, 0.1
    %v1086 = vmul.f32 %v1022, 0.1
    %v1087 = vmul.f32 %v1023, 0.1
    %v1088 = vmul.f32 %v1024, 0.1
    %v1089 = vmul.f32 %v1025, 0.1
    %v1090 = vmul.f32 %v1026, 0.1
    %v1091 = vmul.f32 %v1027, 0.1
    %v1092 = vsel %vm1028, %v996, %v1060
    %v1093 = vsel %vm1029, %v997, %v1061
    %v1094 = vsel %vm1030, %v998, %v1062
    %v1095 = vsel %vm1031, %v999, %v1063
    %v1096 = vsel %vm1032, %v1000, %v1064
    %v1097 = vsel %vm1033, %v1001, %v1065
    %v1098 = vsel %vm1034, %v1002, %v1066
    %v1099 = vsel %vm1035, %v1003, %v1067
    %v1100 = vsel %vm1036, %v1004, %v1068
    %v1101 = vsel %vm1037, %v1005, %v1069
    %v1102 = vsel %vm1038, %v1006, %v1070
    %v1103 = vsel %vm1039, %v1007, %v1071
    %v1104 = vsel %vm1040, %v1008, %v1072
    %v1105 = vsel %vm1041, %v1009, %v1073
    %v1106 = vsel %vm1042, %v1010, %v1074
    %v1107 = vsel %vm1043, %v1011, %v1075
    %v1108 = vsel %vm1044, %v1012, %v1076
    %v1109 = vsel %vm1045, %v1013, %v1077
    %v1110 = vsel %vm1046, %v1014, %v1078
    %v1111 = vsel %vm1047, %v1015, %v1079
    %v1112 = vsel %vm1048, %v1016, %v1080
    %v1113 = vsel %vm1049, %v1017, %v1081
    %v1114 = vsel %vm1050, %v1018, %v1082
    %v1115 = vsel %vm1051, %v1019, %v1083
    %v1116 = vsel %vm1052, %v1020, %v1084
    %v1117 = vsel %vm1053, %v1021, %v1085
    %v1118 = vsel %vm1054, %v1022, %v1086
    %v1119 = vsel %vm1055, %v1023, %v1087
    %v1120 = vsel %vm1056, %v1024, %v1088
    %v1121 = vsel %vm1057, %v1025, %v1089
    %v1122 = vsel %vm1058, %v1026, %v1090
    %v1123 = vsel %vm1059, %v1027, %v1091
    %v1124 = vadd.f32 %v1092, %v55
    %v1125 = vadd.f32 %v1093, %v56
    %v1126 = vadd.f32 %v1094, %v57
    %v1127 = vadd.f32 %v1095, %v58
    %v1128 = vadd.f32 %v1096, %v59
    %v1129 = vadd.f32 %v1097, %v60
    %v1130 = vadd.f32 %v1098, %v61
    %v1131 = vadd.f32 %v1099, %v62
    %v1132 = vadd.f32 %v1100, %v63
    %v1133 = vadd.f32 %v1101, %v64
    %v1134 = vadd.f32 %v1102, %v65
    %v1135 = vadd.f32 %v1103, %v66
    %v1136 = vadd.f32 %v1104, %v67
    %v1137 = vadd.f32 %v1105, %v68
    %v1138 = vadd.f32 %v1106, %v69
    %v1139 = vadd.f32 %v1107, %v70
    %v1140 = vadd.f32 %v1108, %v71
    %v1141 = vadd.f32 %v1109, %v72
    %v1142 = vadd.f32 %v1110, %v73
    %v1143 = vadd.f32 %v1111, %v74
    %v1144 = vadd.f32 %v1112, %v75
    %v1145 = vadd.f32 %v1113, %v76
    %v1146 = vadd.f32 %v1114, %v77
    %v1147 = vadd.f32 %v1115, %v78
    %v1148 = vadd.f32 %v1116, %v79
    %v1149 = vadd.f32 %v1117, %v80
    %v1150 = vadd.f32 %v1118, %v81
    %v1151 = vadd.f32 %v1119, %v82
    %v1152 = vadd.f32 %v1120, %v83
    %v1153 = vadd.f32 %v1121, %v84
    %v1154 = vadd.f32 %v1122, %v85
    %v1155 = vadd.f32 %v1123, %v86
    %1156 = vst [vmem:[#allocation9] sm:$0xff] %v1124
    %1157 = vst [vmem:[#allocation9 + $0x8] sm:$0xff] %v1125
    %1158 = vst [vmem:[#allocation9 + $0x10] sm:$0xff] %v1126
    %1159 = vst [vmem:[#allocation9 + $0x18] sm:$0xff] %v1127
    %1160 = vst [vmem:[#allocation9 + $0x20] sm:$0xff] %v1128
    %1161 = vst [vmem:[#allocation9 + $0x28] sm:$0xff] %v1129
    %1162 = vst [vmem:[#allocation9 + $0x30] sm:$0xff] %v1130
    %1163 = vst [vmem:[#allocation9 + $0x38] sm:$0xff] %v1131
    %1164 = vst [vmem:[#allocation9 + $0x40] sm:$0xff] %v1132
    %1165 = vst [vmem:[#allocation9 + $0x48] sm:$0xff] %v1133
    %1166 = vst [vmem:[#allocation9 + $0x50] sm:$0xff] %v1134
    %1167 = vst [vmem:[#allocation9 + $0x58] sm:$0xff] %v1135
    %1168 = vst [vmem:[#allocation9 + $0x60] sm:$0xff] %v1136
    %1169 = vst [vmem:[#allocation9 + $0x68] sm:$0xff] %v1137
    %1170 = vst [vmem:[#allocation9 + $0x70] sm:$0xff] %v1138
    %1171 = vst [vmem:[#allocation9 + $0x78] sm:$0xff] %v1139
    %1172 = vst [vmem:[#allocation9 + $0x80] sm:$0xff] %v1140
    %1173 = vst [vmem:[#allocation9 + $0x88] sm:$0xff] %v1141
    %1174 = vst [vmem:[#allocation9 + $0x90] sm:$0xff] %v1142
    %1175 = vst [vmem:[#allocation9 + $0x98] sm:$0xff] %v1143
    %1176 = vst [vmem:[#allocation9 + $0xa0] sm:$0xff] %v1144
    %1177 = vst [vmem:[#allocation9 + $0xa8] sm:$0xff] %v1145
    %1178 = vst [vmem:[#allocation9 + $0xb0] sm:$0xff] %v1146
    %1179 = vst [vmem:[#allocation9 + $0xb8] sm:$0xff] %v1147
    %1180 = vst [vmem:[#allocation9 + $0xc0] sm:$0xff] %v1148
    %1181 = vst [vmem:[#allocation9 + $0xc8] sm:$0xff] %v1149
    %1182 = vst [vmem:[#allocation9 + $0xd0] sm:$0xff] %v1150
    %1183 = vst [vmem:[#allocation9 + $0xd8] sm:$0xff] %v1151
    %1184 = vst [vmem:[#allocation9 + $0xe0] sm:$0xff] %v1152
    %1185 = vst [vmem:[#allocation9 + $0xe8] sm:$0xff] %v1153
    %1186 = vst [vmem:[#allocation9 + $0xf0] sm:$0xff] %v1154
    %1187 = vst [vmem:[#allocation9 + $0xf8] sm:$0xff] %v1155
    // Predicated region
    $region30: #{tpu_custom_call.1} parent=1 // pred_check
      _
    $region31: #{tpu_custom_call.1} parent=1 // pred_check_branch
      %1189 = sbr.rel (0) target = $region33
    $region32: #{tpu_custom_call.1} parent=1 // pred_region
      %1191 = vsyncadd [#allocation6], 0
      %s1192 = sshll.u32 [#allocation9], 4
      %s1193 = int_to_ptr.vmem [resolvable:$true] %s1192
      %s1194 = sshll.u32 %s6, 4
      %s1195 = int_to_ptr.hbm [resolvable:$true] %s1194
      %1200 = dma.vmem_to_hbm [thread:$0]  %s1193, 4096, %s1195, [#allocation6], 128, 128, 8
    $region33: #{tpu_custom_call.1} parent=1 // pred_fallthru
      _
    // Predicated region
    $region34: #{tpu_custom_call.1} parent=1 // pred_check
      _
    $region35: #{tpu_custom_call.1} parent=1 // pred_check_branch
      %1202 = sbr.rel (0) target = $region37
    $region36: #{tpu_custom_call.1} parent=1 // pred_region
      %1204 = dma.done [#allocation6], 4096
    $region37: #{tpu_custom_call.1} parent=1 // pred_fallthru
      _
    %1205 = vsyncpa [#allocation5], 1
    %1206 = vsyncpa [#allocation8], 1
    %1207 = vsyncpa [#allocation6], 1

// kernel: tpu_custom_call.1
$region0: #{tpu_custom_call.1}
  #allocation0 [shape = 'u32[]', space=smem, size = 0x4, offset = 0x4, fixed_abs, tag = 'smem constant byte address 0x4 - core index']
  #allocation1 [shape = 'u32[72,128]{1,0:T(1,128)}', space=vmem, size = 0x9000, scoped, tag = 'internal scratch']
  #allocation2 [shape = 's32[1]{0}', space=sflag, size = 0x4, scoped, tag = 'scoped memory for tpu_custom_call.1']
  #allocation3 [shape = 's32[1]{0:T(128)S(6)}', space=smem, size = 0x200, scoped, tag = 'prefetched SMEM operand 0']
  %s0 = inlined_call_operand.<no memory space> [shape: s32[1], index: 0, kind: input, shape index: {}]
  %s1 = inlined_call_operand.hbm [shape: f32[256,128], index: 1, kind: input, shape index: {}]
  %s2 = inlined_call_operand.hbm [shape: f32[128,128], index: 2, kind: input, shape index: {}]
  %s3 = inlined_call_operand.vmem [shape: f32[1,128], index: 3, kind: input, shape index: {}]
  %s4 = inlined_call_operand.vmem [shape: f32[1,128], index: 4, kind: input, shape index: {}]
  %s5 = inlined_call_operand.vmem [shape: f32[1,128], index: 5, kind: input, shape index: {}]
  %s6 = inlined_call_operand.hbm [shape: f32[256,128], index: 6, kind: output, shape index: {}]
  %s7 = sld [smem:[#allocation0]]
  $region38: #{tpu_custom_call.1} parent=0
    _
  %s9 = ssub.s32 1, %s7
  %s10 = scalar_select 0, %s9, %s7
  %11 = sst [smem:[#allocation3]] %s0
  $region1: #{tpu_custom_call.1} parent=0
    #allocation4 [shape = 'u8[131072]{0}', space=vmem, size = 0x20000, scoped, tag = 'input window, operand 1, single buffered']
    #allocation5 [shape = 's32[1]{0}', space=sflag, size = 0x4, scoped, tag = 'scoped memory for tpu_custom_call.1']
    #allocation6 [shape = 's32[1]{0}', space=sflag, size = 0x4, scoped, tag = 'scoped memory for tpu_custom_call.1']
    #allocation7 [shape = 'u8[65536]{0}', space=vmem, size = 0x10000, scoped, tag = 'input window, operand 2, single buffered']
    #allocation8 [shape = 's32[1]{0}', space=sflag, size = 0x4, scoped, tag = 'scoped memory for tpu_custom_call.1']
    #allocation9 [shape = 'u8[131072]{0}', space=vmem, size = 0x20000, scoped, tag = 'output window, operand 0, single buffered']
    %12 = vsyncpa [#allocation5], 0
    %13 = vsyncpa [#allocation8], 0
    %14 = vsyncpa [#allocation6], 0
    // Predicated region
    $region2: #{tpu_custom_call.1} parent=1 // pred_check
      _
    $region3: #{tpu_custom_call.1} parent=1 // pred_check_branch
      %16 = sbr.rel (0) target = $region5
    $region4: #{tpu_custom_call.1} parent=1 // pred_region
      %18 = vsyncadd [#allocation5], 0
      %s19 = sshll.u32 %s1, 4
      %s20 = int_to_ptr.hbm [resolvable:$true] %s19
      %s21 = sshll.u32 [#allocation4], 4
      %s22 = int_to_ptr.vmem [resolvable:$true] %s21
      %27 = dma.hbm_to_vmem [thread:$0]  %s20, 4096, %s22, [#allocation5], 128, 128, 8
    $region5: #{tpu_custom_call.1} parent=1 // pred_fallthru
      _
    // Predicated region
    $region6: #{tpu_custom_call.1} parent=1 // pred_check
      _
    $region7: #{tpu_custom_call.1} parent=1 // pred_check_branch
      %29 = sbr.rel (0) target = $region9
    $region8: #{tpu_custom_call.1} parent=1 // pred_region
      %31 = vsyncadd [#allocation8], 0
      %s32 = sshll.u32 %s2, 4
      %s33 = int_to_ptr.hbm [resolvable:$true] %s32
      %s34 = sshll.u32 [#allocation7], 4
      %s35 = int_to_ptr.vmem [resolvable:$true] %s34
      %40 = dma.hbm_to_vmem [thread:$0]  %s33, 2048, %s35, [#allocation8], 128, 128, 8
    $region9: #{tpu_custom_call.1} parent=1 // pred_fallthru
      _
    // Predicated region
    $region10: #{tpu_custom_call.1} parent=1 // pred_check
      _
    $region11: #{tpu_custom_call.1} parent=1 // pred_check_branch
      %42 = sbr.rel (0) target = $region13
    $region12: #{tpu_custom_call.1} parent=1 // pred_region
      _
    $region13: #{tpu_custom_call.1} parent=1 // pred_fallthru
      _
    // Predicated region
    $region14: #{tpu_custom_call.1} parent=1 // pred_check
      _
    $region15: #{tpu_custom_call.1} parent=1 // pred_check_branch
      %44 = sbr.rel (0) target = $region17
    $region16: #{tpu_custom_call.1} parent=1 // pred_region
      _
    $region17: #{tpu_custom_call.1} parent=1 // pred_fallthru
      _
    // Predicated region
    $region18: #{tpu_custom_call.1} parent=1 // pred_check
      _
    $region19: #{tpu_custom_call.1} parent=1 // pred_check_branch
      %46 = sbr.rel (0) target = $region21
    $region20: #{tpu_custom_call.1} parent=1 // pred_region
      _
    $region21: #{tpu_custom_call.1} parent=1 // pred_fallthru
      _
    // Predicated region
    $region22: #{tpu_custom_call.1} parent=1 // pred_check
      _
    $region23: #{tpu_custom_call.1} parent=1 // pred_check_branch
      %48 = sbr.rel (0) target = $region25
    $region24: #{tpu_custom_call.1} parent=1 // pred_region
      %50 = dma.done [#allocation5], 4096
    $region25: #{tpu_custom_call.1} parent=1 // pred_fallthru
      _
    // Predicated region
    $region26: #{tpu_custom_call.1} parent=1 // pred_check
      _
    $region27: #{tpu_custom_call.1} parent=1 // pred_check_branch
      %52 = sbr.rel (0) target = $region29
    $region28: #{tpu_custom_call.1} parent=1 // pred_region
      %54 = dma.done [#allocation8], 2048
    $region29: #{tpu_custom_call.1} parent=1 // pred_fallthru
      _
    %v55 = vld [vmem:[#allocation4] sm:$0xff]
    %v56 = vld [vmem:[#allocation4 + $0x8] sm:$0xff]
    %v57 = vld [vmem:[#allocation4 + $0x10] sm:$0xff]
    %v58 = vld [vmem:[#allocation4 + $0x18] sm:$0xff]
    %v59 = vld [vmem:[#allocation4 + $0x20] sm:$0xff]
    %v60 = vld [vmem:[#allocation4 + $0x28] sm:$0xff]
    %v61 = vld [vmem:[#allocation4 + $0x30] sm:$0xff]
    %v62 = vld [vmem:[#allocation4 + $0x38] sm:$0xff]
    %v63 = vld [vmem:[#allocation4 + $0x40] sm:$0xff]
    %v64 = vld [vmem:[#allocation4 + $0x48] sm:$0xff]
    %v65 = vld [vmem:[#allocation4 + $0x50] sm:$0xff]
    %v66 = vld [vmem:[#allocation4 + $0x58] sm:$0xff]
    %v67 = vld [vmem:[#allocation4 + $0x60] sm:$0xff]
    %v68 = vld [vmem:[#allocation4 + $0x68] sm:$0xff]
    %v69 = vld [vmem:[#allocation4 + $0x70] sm:$0xff]
    %v70 = vld [vmem:[#allocation4 + $0x78] sm:$0xff]
    %v71 = vld [vmem:[#allocation4 + $0x80] sm:$0xff]
    %v72 = vld [vmem:[#allocation4 + $0x88] sm:$0xff]
    %v73 = vld [vmem:[#allocation4 + $0x90] sm:$0xff]
    %v74 = vld [vmem:[#allocation4 + $0x98] sm:$0xff]
    %v75 = vld [vmem:[#allocation4 + $0xa0] sm:$0xff]
    %v76 = vld [vmem:[#allocation4 + $0xa8] sm:$0xff]
    %v77 = vld [vmem:[#allocation4 + $0xb0] sm:$0xff]
    %v78 = vld [vmem:[#allocation4 + $0xb8] sm:$0xff]
    %v79 = vld [vmem:[#allocation4 + $0xc0] sm:$0xff]
    %v80 = vld [vmem:[#allocation4 + $0xc8] sm:$0xff]
    %v81 = vld [vmem:[#allocation4 + $0xd0] sm:$0xff]
    %v82 = vld [vmem:[#allocation4 + $0xd8] sm:$0xff]
    %v83 = vld [vmem:[#allocation4 + $0xe0] sm:$0xff]
    %v84 = vld [vmem:[#allocation4 + $0xe8] sm:$0xff]
    %v85 = vld [vmem:[#allocation4 + $0xf0] sm:$0xff]
    %v86 = vld [vmem:[#allocation4 + $0xf8] sm:$0xff]
    %v87 = vld [vmem:[#allocation7] sm:$0xff]
    %v88 = vld [vmem:[#allocation7 + $0x8] sm:$0xff]
    %v89 = vld [vmem:[#allocation7 + $0x10] sm:$0xff]
    %v90 = vld [vmem:[#allocation7 + $0x18] sm:$0xff]
    %v91 = vld [vmem:[#allocation7 + $0x20] sm:$0xff]
    %v92 = vld [vmem:[#allocation7 + $0x28] sm:$0xff]
    %v93 = vld [vmem:[#allocation7 + $0x30] sm:$0xff]
    %v94 = vld [vmem:[#allocation7 + $0x38] sm:$0xff]
    %v95 = vld [vmem:[#allocation7 + $0x40] sm:$0xff]
    %v96 = vld [vmem:[#allocation7 + $0x48] sm:$0xff]
    %v97 = vld [vmem:[#allocation7 + $0x50] sm:$0xff]
    %v98 = vld [vmem:[#allocation7 + $0x58] sm:$0xff]
    %v99 = vld [vmem:[#allocation7 + $0x60] sm:$0xff]
    %v100 = vld [vmem:[#allocation7 + $0x68] sm:$0xff]
    %v101 = vld [vmem:[#allocation7 + $0x70] sm:$0xff]
    %v102 = vld [vmem:[#allocation7 + $0x78] sm:$0xff]
    %v103 = vld [vmem:[%s3] sm:$0x1]
    %v105 = vperm.slane %v103, 0
    %107 = vmatpush.msra.mxu0 %v102
    %108 = vmatpush.msra.mxu0 %v101
    %109 = vmatpush.msra.mxu0 %v100
    %110 = vmatpush.msra.mxu0 %v99
    %111 = vmatpush.msra.mxu0 %v98
    %112 = vmatpush.msra.mxu0 %v97
    %113 = vmatpush.msra.mxu0 %v96
    %114 = vmatpush.msra.mxu0 %v95
    %115 = vmatpush.msra.mxu0 %v94
    %116 = vmatpush.msra.mxu0 %v93
    %117 = vmatpush.msra.mxu0 %v92
    %118 = vmatpush.msra.mxu0 %v91
    %119 = vmatpush.msra.mxu0 %v90
    %120 = vmatpush.msra.mxu0 %v89
    %121 = vmatpush.msra.mxu0 %v88
    %122 = vmatpush.msra.mxu0 %v87
    %123 = vmatmul.f32.gmra.mxu0 %v55
    %v124 = vpop.f32.mrf.mxu0
    %v125 = vadd.f32 %v105, %v124
    %126 = vmatmul.f32.gmra.mxu0 %v56
    %v127 = vpop.f32.mrf.mxu0
    %v128 = vadd.f32 %v105, %v127
    %129 = vmatmul.f32.gmra.mxu0 %v57
    %v130 = vpop.f32.mrf.mxu0
    %v131 = vadd.f32 %v105, %v130
    %132 = vmatmul.f32.gmra.mxu0 %v58
    %v133 = vpop.f32.mrf.mxu0
    %v134 = vadd.f32 %v105, %v133
    %135 = vmatmul.f32.gmra.mxu0 %v59
    %v136 = vpop.f32.mrf.mxu0
    %v137 = vadd.f32 %v105, %v136
    %138 = vmatmul.f32.gmra.mxu0 %v60
    %v139 = vpop.f32.mrf.mxu0
    %v140 = vadd.f32 %v105, %v139
    %141 = vmatmul.f32.gmra.mxu0 %v61
    %v142 = vpop.f32.mrf.mxu0
    %v143 = vadd.f32 %v105, %v142
    %144 = vmatmul.f32.gmra.mxu0 %v62
    %v145 = vpop.f32.mrf.mxu0
    %v146 = vadd.f32 %v105, %v145
    %147 = vmatmul.f32.gmra.mxu0 %v63
    %v148 = vpop.f32.mrf.mxu0
    %v149 = vadd.f32 %v105, %v148
    %150 = vmatmul.f32.gmra.mxu0 %v64
    %v151 = vpop.f32.mrf.mxu0
    %v152 = vadd.f32 %v105, %v151
    %153 = vmatmul.f32.gmra.mxu0 %v65
    %v154 = vpop.f32.mrf.mxu0
    %v155 = vadd.f32 %v105, %v154
    %156 = vmatmul.f32.gmra.mxu0 %v66
    %v157 = vpop.f32.mrf.mxu0
    %v158 = vadd.f32 %v105, %v157
    %159 = vmatmul.f32.gmra.mxu0 %v67
    %v160 = vpop.f32.mrf.mxu0
    %v161 = vadd.f32 %v105, %v160
    %162 = vmatmul.f32.gmra.mxu0 %v68
    %v163 = vpop.f32.mrf.mxu0
    %v164 = vadd.f32 %v105, %v163
    %165 = vmatmul.f32.gmra.mxu0 %v69
    %v166 = vpop.f32.mrf.mxu0
    %v167 = vadd.f32 %v105, %v166
    %168 = vmatmul.f32.gmra.mxu0 %v70
    %v169 = vpop.f32.mrf.mxu0
    %v170 = vadd.f32 %v105, %v169
    %171 = vmatmul.f32.gmra.mxu0 %v71
    %v172 = vpop.f32.mrf.mxu0
    %v173 = vadd.f32 %v105, %v172
    %174 = vmatmul.f32.gmra.mxu0 %v72
    %v175 = vpop.f32.mrf.mxu0
    %v176 = vadd.f32 %v105, %v175
    %177 = vmatmul.f32.gmra.mxu0 %v73
    %v178 = vpop.f32.mrf.mxu0
    %v179 = vadd.f32 %v105, %v178
    %180 = vmatmul.f32.gmra.mxu0 %v74
    %v181 = vpop.f32.mrf.mxu0
    %v182 = vadd.f32 %v105, %v181
    %183 = vmatmul.f32.gmra.mxu0 %v75
    %v184 = vpop.f32.mrf.mxu0
    %v185 = vadd.f32 %v105, %v184
    %186 = vmatmul.f32.gmra.mxu0 %v76
    %v187 = vpop.f32.mrf.mxu0
    %v188 = vadd.f32 %v105, %v187
    %189 = vmatmul.f32.gmra.mxu0 %v77
    %v190 = vpop.f32.mrf.mxu0
    %v191 = vadd.f32 %v105, %v190
    %192 = vmatmul.f32.gmra.mxu0 %v78
    %v193 = vpop.f32.mrf.mxu0
    %v194 = vadd.f32 %v105, %v193
    %195 = vmatmul.f32.gmra.mxu0 %v79
    %v196 = vpop.f32.mrf.mxu0
    %v197 = vadd.f32 %v105, %v196
    %198 = vmatmul.f32.gmra.mxu0 %v80
    %v199 = vpop.f32.mrf.mxu0
    %v200 = vadd.f32 %v105, %v199
    %201 = vmatmul.f32.gmra.mxu0 %v81
    %v202 = vpop.f32.mrf.mxu0
    %v203 = vadd.f32 %v105, %v202
    %204 = vmatmul.f32.gmra.mxu0 %v82
    %v205 = vpop.f32.mrf.mxu0
    %v206 = vadd.f32 %v105, %v205
    %207 = vmatmul.f32.gmra.mxu0 %v83
    %v208 = vpop.f32.mrf.mxu0
    %v209 = vadd.f32 %v105, %v208
    %210 = vmatmul.f32.gmra.mxu0 %v84
    %v211 = vpop.f32.mrf.mxu0
    %v212 = vadd.f32 %v105, %v211
    %213 = vmatmul.f32.gmra.mxu0 %v85
    %v214 = vpop.f32.mrf.mxu0
    %v215 = vadd.f32 %v105, %v214
    %216 = vmatmul.f32.gmra.mxu0 %v86
    %v217 = vpop.f32.mrf.mxu0
    %v218 = vadd.f32 %v105, %v217
    %219 = vdwg.mxu0
    %220 = vadd.xlane.f32.xlu0 %v125
    %v221 = vpop.xlane.xlu0 %220
    %222 = vadd.xlane.f32.xlu0 %v128
    %v223 = vpop.xlane.xlu0 %222
    %224 = vadd.xlane.f32.xlu0 %v131
    %v225 = vpop.xlane.xlu0 %224
    %226 = vadd.xlane.f32.xlu0 %v134
    %v227 = vpop.xlane.xlu0 %226
    %228 = vadd.xlane.f32.xlu0 %v137
    %v229 = vpop.xlane.xlu0 %228
    %230 = vadd.xlane.f32.xlu0 %v140
    %v231 = vpop.xlane.xlu0 %230
    %232 = vadd.xlane.f32.xlu0 %v143
    %v233 = vpop.xlane.xlu0 %232
    %234 = vadd.xlane.f32.xlu0 %v146
    %v235 = vpop.xlane.xlu0 %234
    %236 = vadd.xlane.f32.xlu0 %v149
    %v237 = vpop.xlane.xlu0 %236
    %238 = vadd.xlane.f32.xlu0 %v152
    %v239 = vpop.xlane.xlu0 %238
    %240 = vadd.xlane.f32.xlu0 %v155
    %v241 = vpop.xlane.xlu0 %240
    %242 = vadd.xlane.f32.xlu0 %v158
    %v243 = vpop.xlane.xlu0 %242
    %244 = vadd.xlane.f32.xlu0 %v161
    %v245 = vpop.xlane.xlu0 %244
    %246 = vadd.xlane.f32.xlu0 %v164
    %v247 = vpop.xlane.xlu0 %246
    %248 = vadd.xlane.f32.xlu0 %v167
    %v249 = vpop.xlane.xlu0 %248
    %250 = vadd.xlane.f32.xlu0 %v170
    %v251 = vpop.xlane.xlu0 %250
    %252 = vadd.xlane.f32.xlu0 %v173
    %v253 = vpop.xlane.xlu0 %252
    %254 = vadd.xlane.f32.xlu0 %v176
    %v255 = vpop.xlane.xlu0 %254
    %256 = vadd.xlane.f32.xlu0 %v179
    %v257 = vpop.xlane.xlu0 %256
    %258 = vadd.xlane.f32.xlu0 %v182
    %v259 = vpop.xlane.xlu0 %258
    %260 = vadd.xlane.f32.xlu0 %v185
    %v261 = vpop.xlane.xlu0 %260
    %262 = vadd.xlane.f32.xlu0 %v188
    %v263 = vpop.xlane.xlu0 %262
    %264 = vadd.xlane.f32.xlu0 %v191
    %v265 = vpop.xlane.xlu0 %264
    %266 = vadd.xlane.f32.xlu0 %v194
    %v267 = vpop.xlane.xlu0 %266
    %268 = vadd.xlane.f32.xlu0 %v197
    %v269 = vpop.xlane.xlu0 %268
    %270 = vadd.xlane.f32.xlu0 %v200
    %v271 = vpop.xlane.xlu0 %270
    %272 = vadd.xlane.f32.xlu0 %v203
    %v273 = vpop.xlane.xlu0 %272
    %274 = vadd.xlane.f32.xlu0 %v206
    %v275 = vpop.xlane.xlu0 %274
    %276 = vadd.xlane.f32.xlu0 %v209
    %v277 = vpop.xlane.xlu0 %276
    %278 = vadd.xlane.f32.xlu0 %v212
    %v279 = vpop.xlane.xlu0 %278
    %280 = vadd.xlane.f32.xlu0 %v215
    %v281 = vpop.xlane.xlu0 %280
    %282 = vadd.xlane.f32.xlu0 %v218
    %v283 = vpop.xlane.xlu0 %282
    %v284 = vmul.f32 %v221, 0.0078125
    %v285 = vmul.f32 %v223, 0.0078125
    %v286 = vmul.f32 %v225, 0.0078125
    %v287 = vmul.f32 %v227, 0.0078125
    %v288 = vmul.f32 %v229, 0.0078125
    %v289 = vmul.f32 %v231, 0.0078125
    %v290 = vmul.f32 %v233, 0.0078125
    %v291 = vmul.f32 %v235, 0.0078125
    %v292 = vmul.f32 %v237, 0.0078125
    %v293 = vmul.f32 %v239, 0.0078125
    %v294 = vmul.f32 %v241, 0.0078125
    %v295 = vmul.f32 %v243, 0.0078125
    %v296 = vmul.f32 %v245, 0.0078125
    %v297 = vmul.f32 %v247, 0.0078125
    %v298 = vmul.f32 %v249, 0.0078125
    %v299 = vmul.f32 %v251, 0.0078125
    %v300 = vmul.f32 %v253, 0.0078125
    %v301 = vmul.f32 %v255, 0.0078125
    %v302 = vmul.f32 %v257, 0.0078125
    %v303 = vmul.f32 %v259, 0.0078125
    %v304 = vmul.f32 %v261, 0.0078125
    %v305 = vmul.f32 %v263, 0.0078125
    %v306 = vmul.f32 %v265, 0.0078125
    %v307 = vmul.f32 %v267, 0.0078125
    %v308 = vmul.f32 %v269, 0.0078125
    %v309 = vmul.f32 %v271, 0.0078125
    %v310 = vmul.f32 %v273, 0.0078125
    %v311 = vmul.f32 %v275, 0.0078125
    %v312 = vmul.f32 %v277, 0.0078125
    %v313 = vmul.f32 %v279, 0.0078125
    %v314 = vmul.f32 %v281, 0.0078125
    %v315 = vmul.f32 %v283, 0.0078125
    %v316 = vmul.f32 %v125, %v125
    %v317 = vmul.f32 %v128, %v128
    %v318 = vmul.f32 %v131, %v131
    %v319 = vmul.f32 %v134, %v134
    %v320 = vmul.f32 %v137, %v137
    %v321 = vmul.f32 %v140, %v140
    %v322 = vmul.f32 %v143, %v143
    %v323 = vmul.f32 %v146, %v146
    %v324 = vmul.f32 %v149, %v149
    %v325 = vmul.f32 %v152, %v152
    %v326 = vmul.f32 %v155, %v155
    %v327 = vmul.f32 %v158, %v158
    %v328 = vmul.f32 %v161, %v161
    %v329 = vmul.f32 %v164, %v164
    %v330 = vmul.f32 %v167, %v167
    %v331 = vmul.f32 %v170, %v170
    %v332 = vmul.f32 %v173, %v173
    %v333 = vmul.f32 %v176, %v176
    %v334 = vmul.f32 %v179, %v179
    %v335 = vmul.f32 %v182, %v182
    %v336 = vmul.f32 %v185, %v185
    %v337 = vmul.f32 %v188, %v188
    %v338 = vmul.f32 %v191, %v191
    %v339 = vmul.f32 %v194, %v194
    %v340 = vmul.f32 %v197, %v197
    %v341 = vmul.f32 %v200, %v200
    %v342 = vmul.f32 %v203, %v203
    %v343 = vmul.f32 %v206, %v206
    %v344 = vmul.f32 %v209, %v209
    %v345 = vmul.f32 %v212, %v212
    %v346 = vmul.f32 %v215, %v215
    %v347 = vmul.f32 %v218, %v218
    %348 = vadd.xlane.f32.xlu0 %v316
    %v349 = vpop.xlane.xlu0 %348
    %350 = vadd.xlane.f32.xlu0 %v317
    %v351 = vpop.xlane.xlu0 %350
    %352 = vadd.xlane.f32.xlu0 %v318
    %v353 = vpop.xlane.xlu0 %352
    %354 = vadd.xlane.f32.xlu0 %v319
    %v355 = vpop.xlane.xlu0 %354
    %356 = vadd.xlane.f32.xlu0 %v320
    %v357 = vpop.xlane.xlu0 %356
    %358 = vadd.xlane.f32.xlu0 %v321
    %v359 = vpop.xlane.xlu0 %358
    %360 = vadd.xlane.f32.xlu0 %v322
    %v361 = vpop.xlane.xlu0 %360
    %362 = vadd.xlane.f32.xlu0 %v323
    %v363 = vpop.xlane.xlu0 %362
    %364 = vadd.xlane.f32.xlu0 %v324
    %v365 = vpop.xlane.xlu0 %364
    %366 = vadd.xlane.f32.xlu0 %v325
    %v367 = vpop.xlane.xlu0 %366
    %368 = vadd.xlane.f32.xlu0 %v326
    %v369 = vpop.xlane.xlu0 %368
    %370 = vadd.xlane.f32.xlu0 %v327
    %v371 = vpop.xlane.xlu0 %370
    %372 = vadd.xlane.f32.xlu0 %v328
    %v373 = vpop.xlane.xlu0 %372
    %374 = vadd.xlane.f32.xlu0 %v329
    %v375 = vpop.xlane.xlu0 %374
    %376 = vadd.xlane.f32.xlu0 %v330
    %v377 = vpop.xlane.xlu0 %376
    %378 = vadd.xlane.f32.xlu0 %v331
    %v379 = vpop.xlane.xlu0 %378
    %380 = vadd.xlane.f32.xlu0 %v332
    %v381 = vpop.xlane.xlu0 %380
    %382 = vadd.xlane.f32.xlu0 %v333
    %v383 = vpop.xlane.xlu0 %382
    %384 = vadd.xlane.f32.xlu0 %v334
    %v385 = vpop.xlane.xlu0 %384
    %386 = vadd.xlane.f32.xlu0 %v335
    %v387 = vpop.xlane.xlu0 %386
    %388 = vadd.xlane.f32.xlu0 %v336
    %v389 = vpop.xlane.xlu0 %388
    %390 = vadd.xlane.f32.xlu0 %v337
    %v391 = vpop.xlane.xlu0 %390
    %392 = vadd.xlane.f32.xlu0 %v338
    %v393 = vpop.xlane.xlu0 %392
    %394 = vadd.xlane.f32.xlu0 %v339
    %v395 = vpop.xlane.xlu0 %394
    %396 = vadd.xlane.f32.xlu0 %v340
    %v397 = vpop.xlane.xlu0 %396
    %398 = vadd.xlane.f32.xlu0 %v341
    %v399 = vpop.xlane.xlu0 %398
    %400 = vadd.xlane.f32.xlu0 %v342
    %v401 = vpop.xlane.xlu0 %400
    %402 = vadd.xlane.f32.xlu0 %v343
    %v403 = vpop.xlane.xlu0 %402
    %404 = vadd.xlane.f32.xlu0 %v344
    %v405 = vpop.xlane.xlu0 %404
    %406 = vadd.xlane.f32.xlu0 %v345
    %v407 = vpop.xlane.xlu0 %406
    %408 = vadd.xlane.f32.xlu0 %v346
    %v409 = vpop.xlane.xlu0 %408
    %410 = vadd.xlane.f32.xlu0 %v347
    %v411 = vpop.xlane.xlu0 %410
    %v412 = vmul.f32 %v349, 0.0078125
    %v413 = vmul.f32 %v351, 0.0078125
    %v414 = vmul.f32 %v353, 0.0078125
    %v415 = vmul.f32 %v355, 0.0078125
    %v416 = vmul.f32 %v357, 0.0078125
    %v417 = vmul.f32 %v359, 0.0078125
    %v418 = vmul.f32 %v361, 0.0078125
    %v419 = vmul.f32 %v363, 0.0078125
    %v420 = vmul.f32 %v365, 0.0078125
    %v421 = vmul.f32 %v367, 0.0078125
    %v422 = vmul.f32 %v369, 0.0078125
    %v423 = vmul.f32 %v371, 0.0078125
    %v424 = vmul.f32 %v373, 0.0078125
    %v425 = vmul.f32 %v375, 0.0078125
    %v426 = vmul.f32 %v377, 0.0078125
    %v427 = vmul.f32 %v379, 0.0078125
    %v428 = vmul.f32 %v381, 0.0078125
    %v429 = vmul.f32 %v383, 0.0078125
    %v430 = vmul.f32 %v385, 0.0078125
    %v431 = vmul.f32 %v387, 0.0078125
    %v432 = vmul.f32 %v389, 0.0078125
    %v433 = vmul.f32 %v391, 0.0078125
    %v434 = vmul.f32 %v393, 0.0078125
    %v435 = vmul.f32 %v395, 0.0078125
    %v436 = vmul.f32 %v397, 0.0078125
    %v437 = vmul.f32 %v399, 0.0078125
    %v438 = vmul.f32 %v401, 0.0078125
    %v439 = vmul.f32 %v403, 0.0078125
    %v440 = vmul.f32 %v405, 0.0078125
    %v441 = vmul.f32 %v407, 0.0078125
    %v442 = vmul.f32 %v409, 0.0078125
    %v443 = vmul.f32 %v411, 0.0078125
    %v444 = vmul.f32 %v284, %v284
    %v445 = vmul.f32 %v285, %v285
    %v446 = vmul.f32 %v286, %v286
    %v447 = vmul.f32 %v287, %v287
    %v448 = vmul.f32 %v288, %v288
    %v449 = vmul.f32 %v289, %v289
    %v450 = vmul.f32 %v290, %v290
    %v451 = vmul.f32 %v291, %v291
    %v452 = vmul.f32 %v292, %v292
    %v453 = vmul.f32 %v293, %v293
    %v454 = vmul.f32 %v294, %v294
    %v455 = vmul.f32 %v295, %v295
    %v456 = vmul.f32 %v296, %v296
    %v457 = vmul.f32 %v297, %v297
    %v458 = vmul.f32 %v298, %v298
    %v459 = vmul.f32 %v299, %v299
    %v460 = vmul.f32 %v300, %v300
    %v461 = vmul.f32 %v301, %v301
    %v462 = vmul.f32 %v302, %v302
    %v463 = vmul.f32 %v303, %v303
    %v464 = vmul.f32 %v304, %v304
    %v465 = vmul.f32 %v305, %v305
    %v466 = vmul.f32 %v306, %v306
    %v467 = vmul.f32 %v307, %v307
    %v468 = vmul.f32 %v308, %v308
    %v469 = vmul.f32 %v309, %v309
    %v470 = vmul.f32 %v310, %v310
    %v471 = vmul.f32 %v311, %v311
    %v472 = vmul.f32 %v312, %v312
    %v473 = vmul.f32 %v313, %v313
    %v474 = vmul.f32 %v314, %v314
    %v475 = vmul.f32 %v315, %v315
    %v476 = vsub.f32 %v412, %v444
    %v477 = vsub.f32 %v413, %v445
    %v478 = vsub.f32 %v414, %v446
    %v479 = vsub.f32 %v415, %v447
    %v480 = vsub.f32 %v416, %v448
    %v481 = vsub.f32 %v417, %v449
    %v482 = vsub.f32 %v418, %v450
    %v483 = vsub.f32 %v419, %v451
    %v484 = vsub.f32 %v420, %v452
    %v485 = vsub.f32 %v421, %v453
    %v486 = vsub.f32 %v422, %v454
    %v487 = vsub.f32 %v423, %v455
    %v488 = vsub.f32 %v424, %v456
    %v489 = vsub.f32 %v425, %v457
    %v490 = vsub.f32 %v426, %v458
    %v491 = vsub.f32 %v427, %v459
    %v492 = vsub.f32 %v428, %v460
    %v493 = vsub.f32 %v429, %v461
    %v494 = vsub.f32 %v430, %v462
    %v495 = vsub.f32 %v431, %v463
    %v496 = vsub.f32 %v432, %v464
    %v497 = vsub.f32 %v433, %v465
    %v498 = vsub.f32 %v434, %v466
    %v499 = vsub.f32 %v435, %v467
    %v500 = vsub.f32 %v436, %v468
    %v501 = vsub.f32 %v437, %v469
    %v502 = vsub.f32 %v438, %v470
    %v503 = vsub.f32 %v439, %v471
    %v504 = vsub.f32 %v440, %v472
    %v505 = vsub.f32 %v441, %v473
    %v506 = vsub.f32 %v442, %v474
    %v507 = vsub.f32 %v443, %v475
    %v508 = vmax.f32 %v476, 0.0
    %v509 = vmax.f32 %v477, 0.0
    %v510 = vmax.f32 %v478, 0.0
    %v511 = vmax.f32 %v479, 0.0
    %v512 = vmax.f32 %v480, 0.0
    %v513 = vmax.f32 %v481, 0.0
    %v514 = vmax.f32 %v482, 0.0
    %v515 = vmax.f32 %v483, 0.0
    %v516 = vmax.f32 %v484, 0.0
    %v517 = vmax.f32 %v485, 0.0
    %v518 = vmax.f32 %v486, 0.0
    %v519 = vmax.f32 %v487, 0.0
    %v520 = vmax.f32 %v488, 0.0
    %v521 = vmax.f32 %v489, 0.0
    %v522 = vmax.f32 %v490, 0.0
    %v523 = vmax.f32 %v491, 0.0
    %v524 = vmax.f32 %v492, 0.0
    %v525 = vmax.f32 %v493, 0.0
    %v526 = vmax.f32 %v494, 0.0
    %v527 = vmax.f32 %v495, 0.0
    %v528 = vmax.f32 %v496, 0.0
    %v529 = vmax.f32 %v497, 0.0
    %v530 = vmax.f32 %v498, 0.0
    %v531 = vmax.f32 %v499, 0.0
    %v532 = vmax.f32 %v500, 0.0
    %v533 = vmax.f32 %v501, 0.0
    %v534 = vmax.f32 %v502, 0.0
    %v535 = vmax.f32 %v503, 0.0
    %v536 = vmax.f32 %v504, 0.0
    %v537 = vmax.f32 %v505, 0.0
    %v538 = vmax.f32 %v506, 0.0
    %v539 = vmax.f32 %v507, 0.0
    %v540 = vsub.f32 %v125, %v284
    %v541 = vsub.f32 %v128, %v285
    %v542 = vsub.f32 %v131, %v286
    %v543 = vsub.f32 %v134, %v287
    %v544 = vsub.f32 %v137, %v288
    %v545 = vsub.f32 %v140, %v289
    %v546 = vsub.f32 %v143, %v290
    %v547 = vsub.f32 %v146, %v291
    %v548 = vsub.f32 %v149, %v292
    %v549 = vsub.f32 %v152, %v293
    %v550 = vsub.f32 %v155, %v294
    %v551 = vsub.f32 %v158, %v295
    %v552 = vsub.f32 %v161, %v296
    %v553 = vsub.f32 %v164, %v297
    %v554 = vsub.f32 %v167, %v298
    %v555 = vsub.f32 %v170, %v299
    %v556 = vsub.f32 %v173, %v300
    %v557 = vsub.f32 %v176, %v301
    %v558 = vsub.f32 %v179, %v302
    %v559 = vsub.f32 %v182, %v303
    %v560 = vsub.f32 %v185, %v304
    %v561 = vsub.f32 %v188, %v305
    %v562 = vsub.f32 %v191, %v306
    %v563 = vsub.f32 %v194, %v307
    %v564 = vsub.f32 %v197, %v308
    %v565 = vsub.f32 %v200, %v309
    %v566 = vsub.f32 %v203, %v310
    %v567 = vsub.f32 %v206, %v311
    %v568 = vsub.f32 %v209, %v312
    %v569 = vsub.f32 %v212, %v313
    %v570 = vsub.f32 %v215, %v314
    %v571 = vsub.f32 %v218, %v315
    %v572 = vadd.f32 %v508, 1e-05
    %v573 = vadd.f32 %v509, 1e-05
    %v574 = vadd.f32 %v510, 1e-05
    %v575 = vadd.f32 %v511, 1e-05
    %v576 = vadd.f32 %v512, 1e-05
    %v577 = vadd.f32 %v513, 1e-05
    %v578 = vadd.f32 %v514, 1e-05
    %v579 = vadd.f32 %v515, 1e-05
    %v580 = vadd.f32 %v516, 1e-05
    %v581 = vadd.f32 %v517, 1e-05
    %v582 = vadd.f32 %v518, 1e-05
    %v583 = vadd.f32 %v519, 1e-05
    %v584 = vadd.f32 %v520, 1e-05
    %v585 = vadd.f32 %v521, 1e-05
    %v586 = vadd.f32 %v522, 1e-05
    %v587 = vadd.f32 %v523, 1e-05
    %v588 = vadd.f32 %v524, 1e-05
    %v589 = vadd.f32 %v525, 1e-05
    %v590 = vadd.f32 %v526, 1e-05
    %v591 = vadd.f32 %v527, 1e-05
    %v592 = vadd.f32 %v528, 1e-05
    %v593 = vadd.f32 %v529, 1e-05
    %v594 = vadd.f32 %v530, 1e-05
    %v595 = vadd.f32 %v531, 1e-05
    %v596 = vadd.f32 %v532, 1e-05
    %v597 = vadd.f32 %v533, 1e-05
    %v598 = vadd.f32 %v534, 1e-05
    %v599 = vadd.f32 %v535, 1e-05
    %v600 = vadd.f32 %v536, 1e-05
    %v601 = vadd.f32 %v537, 1e-05
    %v602 = vadd.f32 %v538, 1e-05
    %v603 = vadd.f32 %v539, 1e-05
    %v604 = vrsqrt.pop %v572
    %v605 = vmul.f32 %v604, %v572
    %v606 = vmul.f32 %v605, %v604
    %v607 = vmul.f32 0.5, %v606
    %v608 = vsub.f32 1.5, %v607
    %v609 = vmul.f32 %v604, %v608
    %vm610 = vweird.f32 %v572
    %vm611 = vweird.f32 %v604
    %vm612 = vmor %vm610, %vm611
    %v613 = vsel %vm612, %v604, %v609
    %v614 = vrsqrt.pop %v573
    %v615 = vmul.f32 %v614, %v573
    %v616 = vmul.f32 %v615, %v614
    %v617 = vmul.f32 0.5, %v616
    %v618 = vsub.f32 1.5, %v617
    %v619 = vmul.f32 %v614, %v618
    %vm620 = vweird.f32 %v573
    %vm621 = vweird.f32 %v614
    %vm622 = vmor %vm620, %vm621
    %v623 = vsel %vm622, %v614, %v619
    %v624 = vrsqrt.pop %v574
    %v625 = vmul.f32 %v624, %v574
    %v626 = vmul.f32 %v625, %v624
    %v627 = vmul.f32 0.5, %v626
    %v628 = vsub.f32 1.5, %v627
    %v629 = vmul.f32 %v624, %v628
    %vm630 = vweird.f32 %v574
    %vm631 = vweird.f32 %v624
    %vm632 = vmor %vm630, %vm631
    %v633 = vsel %vm632, %v624, %v629
    %v634 = vrsqrt.pop %v575
    %v635 = vmul.f32 %v634, %v575
    %v636 = vmul.f32 %v635, %v634
    %v637 = vmul.f32 0.5, %v636
    %v638 = vsub.f32 1.5, %v637
    %v639 = vmul.f32 %v634, %v638
    %vm640 = vweird.f32 %v575
    %vm641 = vweird.f32 %v634
    %vm642 = vmor %vm640, %vm641
    %v643 = vsel %vm642, %v634, %v639
    %v644 = vrsqrt.pop %v576
    %v645 = vmul.f32 %v644, %v576
    %v646 = vmul.f32 %v645, %v644
    %v647 = vmul.f32 0.5, %v646
    %v648 = vsub.f32 1.5, %v647
    %v649 = vmul.f32 %v644, %v648
    %vm650 = vweird.f32 %v576
    %vm651 = vweird.f32 %v644
    %vm652 = vmor %vm650, %vm651
    %v653 = vsel %vm652, %v644, %v649
    %v654 = vrsqrt.pop %v577
    %v655 = vmul.f32 %v654, %v577
    %v656 = vmul.f32 %v655, %v654
    %v657 = vmul.f32 0.5, %v656
    %v658 = vsub.f32 1.5, %v657
    %v659 = vmul.f32 %v654, %v658
    %vm660 = vweird.f32 %v577
    %vm661 = vweird.f32 %v654
    %vm662 = vmor %vm660, %vm661
    %v663 = vsel %vm662, %v654, %v659
    %v664 = vrsqrt.pop %v578
    %v665 = vmul.f32 %v664, %v578
    %v666 = vmul.f32 %v665, %v664
    %v667 = vmul.f32 0.5, %v666
    %v668 = vsub.f32 1.5, %v667
    %v669 = vmul.f32 %v664, %v668
    %vm670 = vweird.f32 %v578
    %vm671 = vweird.f32 %v664
    %vm672 = vmor %vm670, %vm671
    %v673 = vsel %vm672, %v664, %v669
    %v674 = vrsqrt.pop %v579
    %v675 = vmul.f32 %v674, %v579
    %v676 = vmul.f32 %v675, %v674
    %v677 = vmul.f32 0.5, %v676
    %v678 = vsub.f32 1.5, %v677
    %v679 = vmul.f32 %v674, %v678
    %vm680 = vweird.f32 %v579
    %vm681 = vweird.f32 %v674
    %vm682 = vmor %vm680, %vm681
    %v683 = vsel %vm682, %v674, %v679
    %v684 = vrsqrt.pop %v580
    %v685 = vmul.f32 %v684, %v580
    %v686 = vmul.f32 %v685, %v684
    %v687 = vmul.f32 0.5, %v686
    %v688 = vsub.f32 1.5, %v687
    %v689 = vmul.f32 %v684, %v688
    %vm690 = vweird.f32 %v580
    %vm691 = vweird.f32 %v684
    %vm692 = vmor %vm690, %vm691
    %v693 = vsel %vm692, %v684, %v689
    %v694 = vrsqrt.pop %v581
    %v695 = vmul.f32 %v694, %v581
    %v696 = vmul.f32 %v695, %v694
    %v697 = vmul.f32 0.5, %v696
    %v698 = vsub.f32 1.5, %v697
    %v699 = vmul.f32 %v694, %v698
    %vm700 = vweird.f32 %v581
    %vm701 = vweird.f32 %v694
    %vm702 = vmor %vm700, %vm701
    %v703 = vsel %vm702, %v694, %v699
    %v704 = vrsqrt.pop %v582
    %v705 = vmul.f32 %v704, %v582
    %v706 = vmul.f32 %v705, %v704
    %v707 = vmul.f32 0.5, %v706
    %v708 = vsub.f32 1.5, %v707
    %v709 = vmul.f32 %v704, %v708
    %vm710 = vweird.f32 %v582
    %vm711 = vweird.f32 %v704
    %vm712 = vmor %vm710, %vm711
    %v713 = vsel %vm712, %v704, %v709
    %v714 = vrsqrt.pop %v583
    %v715 = vmul.f32 %v714, %v583
    %v716 = vmul.f32 %v715, %v714
    %v717 = vmul.f32 0.5, %v716
    %v718 = vsub.f32 1.5, %v717
    %v719 = vmul.f32 %v714, %v718
    %vm720 = vweird.f32 %v583
    %vm721 = vweird.f32 %v714
    %vm722 = vmor %vm720, %vm721
    %v723 = vsel %vm722, %v714, %v719
    %v724 = vrsqrt.pop %v584
    %v725 = vmul.f32 %v724, %v584
    %v726 = vmul.f32 %v725, %v724
    %v727 = vmul.f32 0.5, %v726
    %v728 = vsub.f32 1.5, %v727
    %v729 = vmul.f32 %v724, %v728
    %vm730 = vweird.f32 %v584
    %vm731 = vweird.f32 %v724
    %vm732 = vmor %vm730, %vm731
    %v733 = vsel %vm732, %v724, %v729
    %v734 = vrsqrt.pop %v585
    %v735 = vmul.f32 %v734, %v585
    %v736 = vmul.f32 %v735, %v734
    %v737 = vmul.f32 0.5, %v736
    %v738 = vsub.f32 1.5, %v737
    %v739 = vmul.f32 %v734, %v738
    %vm740 = vweird.f32 %v585
    %vm741 = vweird.f32 %v734
    %vm742 = vmor %vm740, %vm741
    %v743 = vsel %vm742, %v734, %v739
    %v744 = vrsqrt.pop %v586
    %v745 = vmul.f32 %v744, %v586
    %v746 = vmul.f32 %v745, %v744
    %v747 = vmul.f32 0.5, %v746
    %v748 = vsub.f32 1.5, %v747
    %v749 = vmul.f32 %v744, %v748
    %vm750 = vweird.f32 %v586
    %vm751 = vweird.f32 %v744
    %vm752 = vmor %vm750, %vm751
    %v753 = vsel %vm752, %v744, %v749
    %v754 = vrsqrt.pop %v587
    %v755 = vmul.f32 %v754, %v587
    %v756 = vmul.f32 %v755, %v754
    %v757 = vmul.f32 0.5, %v756
    %v758 = vsub.f32 1.5, %v757
    %v759 = vmul.f32 %v754, %v758
    %vm760 = vweird.f32 %v587
    %vm761 = vweird.f32 %v754
    %vm762 = vmor %vm760, %vm761
    %v763 = vsel %vm762, %v754, %v759
    %v764 = vrsqrt.pop %v588
    %v765 = vmul.f32 %v764, %v588
    %v766 = vmul.f32 %v765, %v764
    %v767 = vmul.f32 0.5, %v766
    %v768 = vsub.f32 1.5, %v767
    %v769 = vmul.f32 %v764, %v768
    %vm770 = vweird.f32 %v588
    %vm771 = vweird.f32 %v764
    %vm772 = vmor %vm770, %vm771
    %v773 = vsel %vm772, %v764, %v769
    %v774 = vrsqrt.pop %v589
    %v775 = vmul.f32 %v774, %v589
    %v776 = vmul.f32 %v775, %v774
    %v777 = vmul.f32 0.5, %v776
    %v778 = vsub.f32 1.5, %v777
    %v779 = vmul.f32 %v774, %v778
    %vm780 = vweird.f32 %v589
    %vm781 = vweird.f32 %v774
    %vm782 = vmor %vm780, %vm781
    %v783 = vsel %vm782, %v774, %v779
    %v784 = vrsqrt.pop %v590
    %v785 = vmul.f32 %v784, %v590
    %v786 = vmul.f32 %v785, %v784
    %v787 = vmul.f32 0.5, %v786
    %v788 = vsub.f32 1.5, %v787
    %v789 = vmul.f32 %v784, %v788
    %vm790 = vweird.f32 %v590
    %vm791 = vweird.f32 %v784
    %vm792 = vmor %vm790, %vm791
    %v793 = vsel %vm792, %v784, %v789
    %v794 = vrsqrt.pop %v591
    %v795 = vmul.f32 %v794, %v591
    %v796 = vmul.f32 %v795, %v794
    %v797 = vmul.f32 0.5, %v796
    %v798 = vsub.f32 1.5, %v797
    %v799 = vmul.f32 %v794, %v798
    %vm800 = vweird.f32 %v591
    %vm801 = vweird.f32 %v794
    %vm802 = vmor %vm800, %vm801
    %v803 = vsel %vm802, %v794, %v799
    %v804 = vrsqrt.pop %v592
    %v805 = vmul.f32 %v804, %v592
    %v806 = vmul.f32 %v805, %v804
    %v807 = vmul.f32 0.5, %v806
    %v808 = vsub.f32 1.5, %v807
    %v809 = vmul.f32 %v804, %v808
    %vm810 = vweird.f32 %v592
    %vm811 = vweird.f32 %v804
    %vm812 = vmor %vm810, %vm811
    %v813 = vsel %vm812, %v804, %v809
    %v814 = vrsqrt.pop %v593
    %v815 = vmul.f32 %v814, %v593
    %v816 = vmul.f32 %v815, %v814
    %v817 = vmul.f32 0.5, %v816
    %v818 = vsub.f32 1.5, %v817
    %v819 = vmul.f32 %v814, %v818
    %vm820 = vweird.f32 %v593
    %vm821 = vweird.f32 %v814
    %vm822 = vmor %vm820, %vm821
    %v823 = vsel %vm822, %v814, %v819
    %v824 = vrsqrt.pop %v594
    %v825 = vmul.f32 %v824, %v594
    %v826 = vmul.f32 %v825, %v824
    %v827 = vmul.f32 0.5, %v826
    %v828 = vsub.f32 1.5, %v827
    %v829 = vmul.f32 %v824, %v828
    %vm830 = vweird.f32 %v594
    %vm831 = vweird.f32 %v824
    %vm832 = vmor %vm830, %vm831
    %v833 = vsel %vm832, %v824, %v829
    %v834 = vrsqrt.pop %v595
    %v835 = vmul.f32 %v834, %v595
    %v836 = vmul.f32 %v835, %v834
    %v837 = vmul.f32 0.5, %v836
    %v838 = vsub.f32 1.5, %v837
    %v839 = vmul.f32 %v834, %v838
    %vm840 = vweird.f32 %v595
    %vm841 = vweird.f32 %v834
    %vm842 = vmor %vm840, %vm841
    %v843 = vsel %vm842, %v834, %v839
    %v844 = vrsqrt.pop %v596
    %v845 = vmul.f32 %v844, %v596
    %v846 = vmul.f32 %v845, %v844
    %v847 = vmul.f32 0.5, %v846
    %v848 = vsub.f32 1.5, %v847
    %v849 = vmul.f32 %v844, %v848
    %vm850 = vweird.f32 %v596
    %vm851 = vweird.f32 %v844
    %vm852 = vmor %vm850, %vm851
    %v853 = vsel %vm852, %v844, %v849
    %v854 = vrsqrt.pop %v597
    %v855 = vmul.f32 %v854, %v597
    %v856 = vmul.f32 %v855, %v854
    %v857 = vmul.f32 0.5, %v856
    %v858 = vsub.f32 1.5, %v857
    %v859 = vmul.f32 %v854, %v858
    %vm860 = vweird.f32 %v597
    %vm861 = vweird.f32 %v854
    %vm862 = vmor %vm860, %vm861
    %v863 = vsel %vm862, %v854, %v859
    %v864 = vrsqrt.pop %v598
    %v865 = vmul.f32 %v864, %v598
    %v866 = vmul.f32 %v865, %v864
    %v867 = vmul.f32 0.5, %v866
    %v868 = vsub.f32 1.5, %v867
    %v869 = vmul.f32 %v864, %v868
    %vm870 = vweird.f32 %v598
    %vm871 = vweird.f32 %v864
    %vm872 = vmor %vm870, %vm871
    %v873 = vsel %vm872, %v864, %v869
    %v874 = vrsqrt.pop %v599
    %v875 = vmul.f32 %v874, %v599
    %v876 = vmul.f32 %v875, %v874
    %v877 = vmul.f32 0.5, %v876
    %v878 = vsub.f32 1.5, %v877
    %v879 = vmul.f32 %v874, %v878
    %vm880 = vweird.f32 %v599
    %vm881 = vweird.f32 %v874
    %vm882 = vmor %vm880, %vm881
    %v883 = vsel %vm882, %v874, %v879
    %v884 = vrsqrt.pop %v600
    %v885 = vmul.f32 %v884, %v600
    %v886 = vmul.f32 %v885, %v884
    %v887 = vmul.f32 0.5, %v886
    %v888 = vsub.f32 1.5, %v887
    %v889 = vmul.f32 %v884, %v888
    %vm890 = vweird.f32 %v600
    %vm891 = vweird.f32 %v884
    %vm892 = vmor %vm890, %vm891
    %v893 = vsel %vm892, %v884, %v889
    %v894 = vrsqrt.pop %v601
    %v895 = vmul.f32 %v894, %v601
    %v896 = vmul.f32 %v895, %v894
    %v897 = vmul.f32 0.5, %v896
    %v898 = vsub.f32 1.5, %v897
    %v899 = vmul.f32 %v894, %v898
    %vm900 = vweird.f32 %v601
    %vm901 = vweird.f32 %v894
    %vm902 = vmor %vm900, %vm901
    %v903 = vsel %vm902, %v894, %v899
    %v904 = vrsqrt.pop %v602
    %v905 = vmul.f32 %v904, %v602
    %v906 = vmul.f32 %v905, %v904
    %v907 = vmul.f32 0.5, %v906
    %v908 = vsub.f32 1.5, %v907
    %v909 = vmul.f32 %v904, %v908
    %vm910 = vweird.f32 %v602
    %vm911 = vweird.f32 %v904
    %vm912 = vmor %vm910, %vm911
    %v913 = vsel %vm912, %v904, %v909
    %v914 = vrsqrt.pop %v603
    %v915 = vmul.f32 %v914, %v603
    %v916 = vmul.f32 %v915, %v914
    %v917 = vmul.f32 0.5, %v916
    %v918 = vsub.f32 1.5, %v917
    %v919 = vmul.f32 %v914, %v918
    %vm920 = vweird.f32 %v603
    %vm921 = vweird.f32 %v914
    %vm922 = vmor %vm920, %vm921
    %v923 = vsel %vm922, %v914, %v919
    %v924 = vmul.f32 %v540, %v613
    %v925 = vmul.f32 %v541, %v623
    %v926 = vmul.f32 %v542, %v633
    %v927 = vmul.f32 %v543, %v643
    %v928 = vmul.f32 %v544, %v653
    %v929 = vmul.f32 %v545, %v663
    %v930 = vmul.f32 %v546, %v673
    %v931 = vmul.f32 %v547, %v683
    %v932 = vmul.f32 %v548, %v693
    %v933 = vmul.f32 %v549, %v703
    %v934 = vmul.f32 %v550, %v713
    %v935 = vmul.f32 %v551, %v723
    %v936 = vmul.f32 %v552, %v733
    %v937 = vmul.f32 %v553, %v743
    %v938 = vmul.f32 %v554, %v753
    %v939 = vmul.f32 %v555, %v763
    %v940 = vmul.f32 %v556, %v773
    %v941 = vmul.f32 %v557, %v783
    %v942 = vmul.f32 %v558, %v793
    %v943 = vmul.f32 %v559, %v803
    %v944 = vmul.f32 %v560, %v813
    %v945 = vmul.f32 %v561, %v823
    %v946 = vmul.f32 %v562, %v833
    %v947 = vmul.f32 %v563, %v843
    %v948 = vmul.f32 %v564, %v853
    %v949 = vmul.f32 %v565, %v863
    %v950 = vmul.f32 %v566, %v873
    %v951 = vmul.f32 %v567, %v883
    %v952 = vmul.f32 %v568, %v893
    %v953 = vmul.f32 %v569, %v903
    %v954 = vmul.f32 %v570, %v913
    %v955 = vmul.f32 %v571, %v923
    %v956 = vld [vmem:[%s4] sm:$0x1]
    %v958 = vperm.slane %v956, 0
    %v960 = vmul.f32 %v924, %v958
    %v961 = vmul.f32 %v925, %v958
    %v962 = vmul.f32 %v926, %v958
    %v963 = vmul.f32 %v927, %v958
    %v964 = vmul.f32 %v928, %v958
    %v965 = vmul.f32 %v929, %v958
    %v966 = vmul.f32 %v930, %v958
    %v967 = vmul.f32 %v931, %v958
    %v968 = vmul.f32 %v932, %v958
    %v969 = vmul.f32 %v933, %v958
    %v970 = vmul.f32 %v934, %v958
    %v971 = vmul.f32 %v935, %v958
    %v972 = vmul.f32 %v936, %v958
    %v973 = vmul.f32 %v937, %v958
    %v974 = vmul.f32 %v938, %v958
    %v975 = vmul.f32 %v939, %v958
    %v976 = vmul.f32 %v940, %v958
    %v977 = vmul.f32 %v941, %v958
    %v978 = vmul.f32 %v942, %v958
    %v979 = vmul.f32 %v943, %v958
    %v980 = vmul.f32 %v944, %v958
    %v981 = vmul.f32 %v945, %v958
    %v982 = vmul.f32 %v946, %v958
    %v983 = vmul.f32 %v947, %v958
    %v984 = vmul.f32 %v948, %v958
    %v985 = vmul.f32 %v949, %v958
    %v986 = vmul.f32 %v950, %v958
    %v987 = vmul.f32 %v951, %v958
    %v988 = vmul.f32 %v952, %v958
    %v989 = vmul.f32 %v953, %v958
    %v990 = vmul.f32 %v954, %v958
    %v991 = vmul.f32 %v955, %v958
    %v992 = vld [vmem:[%s5] sm:$0x1]
    %v994 = vperm.slane %v992, 0
    %v996 = vadd.f32 %v960, %v994
    %v997 = vadd.f32 %v961, %v994
    %v998 = vadd.f32 %v962, %v994
    %v999 = vadd.f32 %v963, %v994
    %v1000 = vadd.f32 %v964, %v994
    %v1001 = vadd.f32 %v965, %v994
    %v1002 = vadd.f32 %v966, %v994
    %v1003 = vadd.f32 %v967, %v994
    %v1004 = vadd.f32 %v968, %v994
    %v1005 = vadd.f32 %v969, %v994
    %v1006 = vadd.f32 %v970, %v994
    %v1007 = vadd.f32 %v971, %v994
    %v1008 = vadd.f32 %v972, %v994
    %v1009 = vadd.f32 %v973, %v994
    %v1010 = vadd.f32 %v974, %v994
    %v1011 = vadd.f32 %v975, %v994
    %v1012 = vadd.f32 %v976, %v994
    %v1013 = vadd.f32 %v977, %v994
    %v1014 = vadd.f32 %v978, %v994
    %v1015 = vadd.f32 %v979, %v994
    %v1016 = vadd.f32 %v980, %v994
    %v1017 = vadd.f32 %v981, %v994
    %v1018 = vadd.f32 %v982, %v994
    %v1019 = vadd.f32 %v983, %v994
    %v1020 = vadd.f32 %v984, %v994
    %v1021 = vadd.f32 %v985, %v994
    %v1022 = vadd.f32 %v986, %v994
    %v1023 = vadd.f32 %v987, %v994
    %v1024 = vadd.f32 %v988, %v994
    %v1025 = vadd.f32 %v989, %v994
    %v1026 = vadd.f32 %v990, %v994
    %v1027 = vadd.f32 %v991, %v994
    %vm1028 = vcmp.ge.f32.partialorder %v996, 0.0
    %vm1029 = vcmp.ge.f32.partialorder %v997, 0.0
    %vm1030 = vcmp.ge.f32.partialorder %v998, 0.0
    %vm1031 = vcmp.ge.f32.partialorder %v999, 0.0
    %vm1032 = vcmp.ge.f32.partialorder %v1000, 0.0
    %vm1033 = vcmp.ge.f32.partialorder %v1001, 0.0
    %vm1034 = vcmp.ge.f32.partialorder %v1002, 0.0
    %vm1035 = vcmp.ge.f32.partialorder %v1003, 0.0
    %vm1036 = vcmp.ge.f32.partialorder %v1004, 0.0
    %vm1037 = vcmp.ge.f32.partialorder %v1005, 0.0
    %vm1038 = vcmp.ge.f32.partialorder %v1006, 0.0
    %vm1039 = vcmp.ge.f32.partialorder %v1007, 0.0
    %vm1040 = vcmp.ge.f32.partialorder %v1008, 0.0
    %vm1041 = vcmp.ge.f32.partialorder %v1009, 0.0
    %vm1042 = vcmp.ge.f32.partialorder %v1010, 0.0
    %vm1043 = vcmp.ge.f32.partialorder %v1011, 0.0
    %vm1044 = vcmp.ge.f32.partialorder %v1012, 0.0
    %vm1045 = vcmp.ge.f32.partialorder %v1013, 0.0
    %vm1046 = vcmp.ge.f32.partialorder %v1014, 0.0
    %vm1047 = vcmp.ge.f32.partialorder %v1015, 0.0
    %vm1048 = vcmp.ge.f32.partialorder %v1016, 0.0
    %vm1049 = vcmp.ge.f32.partialorder %v1017, 0.0
    %vm1050 = vcmp.ge.f32.partialorder %v1018, 0.0
    %vm1051 = vcmp.ge.f32.partialorder %v1019, 0.0
    %vm1052 = vcmp.ge.f32.partialorder %v1020, 0.0
    %vm1053 = vcmp.ge.f32.partialorder %v1021, 0.0
    %vm1054 = vcmp.ge.f32.partialorder %v1022, 0.0
    %vm1055 = vcmp.ge.f32.partialorder %v1023, 0.0
    %vm1056 = vcmp.ge.f32.partialorder %v1024, 0.0
    %vm1057 = vcmp.ge.f32.partialorder %v1025, 0.0
    %vm1058 = vcmp.ge.f32.partialorder %v1026, 0.0
    %vm1059 = vcmp.ge.f32.partialorder %v1027, 0.0
    %v1060 = vmul.f32 %v996, 0.1
    %v1061 = vmul.f32 %v997, 0.1
    %v1062 = vmul.f32 %v998, 0.1
    %v1063 = vmul.f32 %v999, 0.1
    %v1064 = vmul.f32 %v1000, 0.1
    %v1065 = vmul.f32 %v1001, 0.1
    %v1066 = vmul.f32 %v1002, 0.1
    %v1067 = vmul.f32 %v1003, 0.1
    %v1068 = vmul.f32 %v1004, 0.1
    %v1069 = vmul.f32 %v1005, 0.1
    %v1070 = vmul.f32 %v1006, 0.1
    %v1071 = vmul.f32 %v1007, 0.1
    %v1072 = vmul.f32 %v1008, 0.1
    %v1073 = vmul.f32 %v1009, 0.1
    %v1074 = vmul.f32 %v1010, 0.1
    %v1075 = vmul.f32 %v1011, 0.1
    %v1076 = vmul.f32 %v1012, 0.1
    %v1077 = vmul.f32 %v1013, 0.1
    %v1078 = vmul.f32 %v1014, 0.1
    %v1079 = vmul.f32 %v1015, 0.1
    %v1080 = vmul.f32 %v1016, 0.1
    %v1081 = vmul.f32 %v1017, 0.1
    %v1082 = vmul.f32 %v1018, 0.1
    %v1083 = vmul.f32 %v1019, 0.1
    %v1084 = vmul.f32 %v1020, 0.1
    %v1085 = vmul.f32 %v1021, 0.1
    %v1086 = vmul.f32 %v1022, 0.1
    %v1087 = vmul.f32 %v1023, 0.1
    %v1088 = vmul.f32 %v1024, 0.1
    %v1089 = vmul.f32 %v1025, 0.1
    %v1090 = vmul.f32 %v1026, 0.1
    %v1091 = vmul.f32 %v1027, 0.1
    %v1092 = vsel %vm1028, %v996, %v1060
    %v1093 = vsel %vm1029, %v997, %v1061
    %v1094 = vsel %vm1030, %v998, %v1062
    %v1095 = vsel %vm1031, %v999, %v1063
    %v1096 = vsel %vm1032, %v1000, %v1064
    %v1097 = vsel %vm1033, %v1001, %v1065
    %v1098 = vsel %vm1034, %v1002, %v1066
    %v1099 = vsel %vm1035, %v1003, %v1067
    %v1100 = vsel %vm1036, %v1004, %v1068
    %v1101 = vsel %vm1037, %v1005, %v1069
    %v1102 = vsel %vm1038, %v1006, %v1070
    %v1103 = vsel %vm1039, %v1007, %v1071
    %v1104 = vsel %vm1040, %v1008, %v1072
    %v1105 = vsel %vm1041, %v1009, %v1073
    %v1106 = vsel %vm1042, %v1010, %v1074
    %v1107 = vsel %vm1043, %v1011, %v1075
    %v1108 = vsel %vm1044, %v1012, %v1076
    %v1109 = vsel %vm1045, %v1013, %v1077
    %v1110 = vsel %vm1046, %v1014, %v1078
    %v1111 = vsel %vm1047, %v1015, %v1079
    %v1112 = vsel %vm1048, %v1016, %v1080
    %v1113 = vsel %vm1049, %v1017, %v1081
    %v1114 = vsel %vm1050, %v1018, %v1082
    %v1115 = vsel %vm1051, %v1019, %v1083
    %v1116 = vsel %vm1052, %v1020, %v1084
    %v1117 = vsel %vm1053, %v1021, %v1085
    %v1118 = vsel %vm1054, %v1022, %v1086
    %v1119 = vsel %vm1055, %v1023, %v1087
    %v1120 = vsel %vm1056, %v1024, %v1088
    %v1121 = vsel %vm1057, %v1025, %v1089
    %v1122 = vsel %vm1058, %v1026, %v1090
    %v1123 = vsel %vm1059, %v1027, %v1091
    %v1124 = vadd.f32 %v1092, %v55
    %v1125 = vadd.f32 %v1093, %v56
    %v1126 = vadd.f32 %v1094, %v57
    %v1127 = vadd.f32 %v1095, %v58
    %v1128 = vadd.f32 %v1096, %v59
    %v1129 = vadd.f32 %v1097, %v60
    %v1130 = vadd.f32 %v1098, %v61
    %v1131 = vadd.f32 %v1099, %v62
    %v1132 = vadd.f32 %v1100, %v63
    %v1133 = vadd.f32 %v1101, %v64
    %v1134 = vadd.f32 %v1102, %v65
    %v1135 = vadd.f32 %v1103, %v66
    %v1136 = vadd.f32 %v1104, %v67
    %v1137 = vadd.f32 %v1105, %v68
    %v1138 = vadd.f32 %v1106, %v69
    %v1139 = vadd.f32 %v1107, %v70
    %v1140 = vadd.f32 %v1108, %v71
    %v1141 = vadd.f32 %v1109, %v72
    %v1142 = vadd.f32 %v1110, %v73
    %v1143 = vadd.f32 %v1111, %v74
    %v1144 = vadd.f32 %v1112, %v75
    %v1145 = vadd.f32 %v1113, %v76
    %v1146 = vadd.f32 %v1114, %v77
    %v1147 = vadd.f32 %v1115, %v78
    %v1148 = vadd.f32 %v1116, %v79
    %v1149 = vadd.f32 %v1117, %v80
    %v1150 = vadd.f32 %v1118, %v81
    %v1151 = vadd.f32 %v1119, %v82
    %v1152 = vadd.f32 %v1120, %v83
    %v1153 = vadd.f32 %v1121, %v84
    %v1154 = vadd.f32 %v1122, %v85
    %v1155 = vadd.f32 %v1123, %v86
    %1156 = vst [vmem:[#allocation9] sm:$0xff] %v1124
    %1157 = vst [vmem:[#allocation9 + $0x8] sm:$0xff] %v1125
    %1158 = vst [vmem:[#allocation9 + $0x10] sm:$0xff] %v1126
    %1159 = vst [vmem:[#allocation9 + $0x18] sm:$0xff] %v1127
    %1160 = vst [vmem:[#allocation9 + $0x20] sm:$0xff] %v1128
    %1161 = vst [vmem:[#allocation9 + $0x28] sm:$0xff] %v1129
    %1162 = vst [vmem:[#allocation9 + $0x30] sm:$0xff] %v1130
    %1163 = vst [vmem:[#allocation9 + $0x38] sm:$0xff] %v1131
    %1164 = vst [vmem:[#allocation9 + $0x40] sm:$0xff] %v1132
    %1165 = vst [vmem:[#allocation9 + $0x48] sm:$0xff] %v1133
    %1166 = vst [vmem:[#allocation9 + $0x50] sm:$0xff] %v1134
    %1167 = vst [vmem:[#allocation9 + $0x58] sm:$0xff] %v1135
    %1168 = vst [vmem:[#allocation9 + $0x60] sm:$0xff] %v1136
    %1169 = vst [vmem:[#allocation9 + $0x68] sm:$0xff] %v1137
    %1170 = vst [vmem:[#allocation9 + $0x70] sm:$0xff] %v1138
    %1171 = vst [vmem:[#allocation9 + $0x78] sm:$0xff] %v1139
    %1172 = vst [vmem:[#allocation9 + $0x80] sm:$0xff] %v1140
    %1173 = vst [vmem:[#allocation9 + $0x88] sm:$0xff] %v1141
    %1174 = vst [vmem:[#allocation9 + $0x90] sm:$0xff] %v1142
    %1175 = vst [vmem:[#allocation9 + $0x98] sm:$0xff] %v1143
    %1176 = vst [vmem:[#allocation9 + $0xa0] sm:$0xff] %v1144
    %1177 = vst [vmem:[#allocation9 + $0xa8] sm:$0xff] %v1145
    %1178 = vst [vmem:[#allocation9 + $0xb0] sm:$0xff] %v1146
    %1179 = vst [vmem:[#allocation9 + $0xb8] sm:$0xff] %v1147
    %1180 = vst [vmem:[#allocation9 + $0xc0] sm:$0xff] %v1148
    %1181 = vst [vmem:[#allocation9 + $0xc8] sm:$0xff] %v1149
    %1182 = vst [vmem:[#allocation9 + $0xd0] sm:$0xff] %v1150
    %1183 = vst [vmem:[#allocation9 + $0xd8] sm:$0xff] %v1151
    %1184 = vst [vmem:[#allocation9 + $0xe0] sm:$0xff] %v1152
    %1185 = vst [vmem:[#allocation9 + $0xe8] sm:$0xff] %v1153
    %1186 = vst [vmem:[#allocation9 + $0xf0] sm:$0xff] %v1154
    %1187 = vst [vmem:[#allocation9 + $0xf8] sm:$0xff] %v1155
    // Predicated region
    $region30: #{tpu_custom_call.1} parent=1 // pred_check
      _
    $region31: #{tpu_custom_call.1} parent=1 // pred_check_branch
      %1189 = sbr.rel (0) target = $region33
    $region32: #{tpu_custom_call.1} parent=1 // pred_region
      %1191 = vsyncadd [#allocation6], 0
      %s1192 = sshll.u32 [#allocation9], 4
      %s1193 = int_to_ptr.vmem [resolvable:$true] %s1192
      %s1194 = sshll.u32 %s6, 4
      %s1195 = int_to_ptr.hbm [resolvable:$true] %s1194
      %1200 = dma.vmem_to_hbm [thread:$0]  %s1193, 4096, %s1195, [#allocation6], 128, 128, 8
    $region33: #{tpu_custom_call.1} parent=1 // pred_fallthru
      _
    // Predicated region
    $region34: #{tpu_custom_call.1} parent=1 // pred_check
      _
    $region35: #{tpu_custom_call.1} parent=1 // pred_check_branch
      %1202 = sbr.rel (0) target = $region37
    $region36: #{tpu_custom_call.1} parent=1 // pred_region
      %1204 = dma.done [#allocation6], 4096
    $region37: #{tpu_custom_call.1} parent=1 // pred_fallthru
      _
    %1205 = vsyncpa [#allocation5], 1
    %1206 = vsyncpa [#allocation8], 1
    %1207 = vsyncpa [#allocation6], 1

</llo_original>
